<compile_context>
chip_gen: v5e
topology: v5e:2x2
jax: 0.10.0
libtpu: 0.0.40
codegen_flags: <defaults>
</compile_context>

<pallas_src>
import jax
import jax.numpy as jnp
from jax.experimental import pallas as pl
from jax.experimental.pallas import tpu as pltpu


# ---------------------------------------------------------------------------
# Kernel
# ---------------------------------------------------------------------------
def _bilstm_head_kernel(x_ref, mask_ref, wih_ref, b_ref, whh_ref,
                        selg_ref, selh_ref, wout_ref, bout_ref, out_ref):
    """Fused bidirectional LSTM recurrence + linear head for one batch tile.

    x_ref:    (T, tb, D)   embedded tokens, time-major  (f32 or bf16)
    mask_ref: (T, tb, 1)   1.0 where token is valid, else 0.0          (f32)
    wih_ref:  (D, 8H)      fused input weights, columns [i_f,i_b,f_f,f_b,g_f,g_b,o_f,o_b]
    b_ref:    (1, 8H)      fused bias (b_ih + b_hh, both directions)
    whh_ref:  (2H, 8H)     block-diagonal fused hidden weights (rows [h_f | h_b])
    selg_ref: (1, 8H)      1.0 on forward-direction gate columns
    selh_ref: (1, 2H)      1.0 on forward-direction state lanes
    wout_ref: (2H, Cp)     output head, lane-padded to Cp (rows [wout_f ; wout_b])
    bout_ref: (1, Cp)
    out_ref:  (tb, Cp)     logits (valid in [:, :C])
    """
    T, tb, D = x_ref.shape
    H2 = whh_ref.shape[0]            # 2H
    mm_dtype = x_ref.dtype           # bf16 or f32 matmul operands; accumulation is f32.

    # ---- 1. One big fused input projection (all steps / gates / directions) -------
    # (T, tb, D) -> (T*tb, D) is layout-free because tb % 8 == 0 (wrapper guarantees).
    x2 = x_ref[...].reshape(T * tb, D)
    proj = jnp.dot(x2, wih_ref[...], preferred_element_type=jnp.float32) + b_ref[...]
    # proj rows are time-major: rows [t*tb:(t+1)*tb] are the whole batch tile at time t.

    mask = mask_ref[...]                              # (T, tb, 1) f32
    whh = whh_ref[...]

    # Hoisted loop-invariant broadcasts (broadcast_in_dim is not CSE'd).
    sel_g = jnp.broadcast_to(selg_ref[...], (tb, proj.shape[1]))
    inv_sel_g = 1.0 - sel_g
    sel_h = jnp.broadcast_to(selh_ref[...], (tb, H2))
    inv_sel_h = 1.0 - sel_h

    h = jnp.zeros((tb, H2), jnp.float32)              # [h_fwd | h_bwd]
    c = jnp.zeros((tb, H2), jnp.float32)

    # ---- 2. Merged fwd/bwd recurrence, fully unrolled (T is static) ---------------
    # A static Python loop == lax.fori_loop(..., unroll=True) here and keeps every
    # slice index static & tile-aligned.
    for s in range(T):
        t_f = s
        t_b = T - 1 - s
        p_f = proj[t_f * tb:(t_f + 1) * tb, :]        # (tb, 8H) tile-aligned slice
        p_b = proj[t_b * tb:(t_b + 1) * tb, :]
        gx = sel_g * p_f + inv_sel_g * p_b            # fwd cols from x[t_f], bwd from x[t_b]

        gates = gx + jnp.dot(h.astype(mm_dtype), whh,
                             preferred_element_type=jnp.float32)      # (tb, 8H)

        i_g = jax.nn.sigmoid(gates[:, 0 * H2:1 * H2])                 # each (tb, 2H)
        f_g = jax.nn.sigmoid(gates[:, 1 * H2:2 * H2])
        g_g = jnp.tanh(      gates[:, 2 * H2:3 * H2])
        o_g = jax.nn.sigmoid(gates[:, 3 * H2:4 * H2])

        c_new = f_g * c + i_g * g_g
        h_new = o_g * jnp.tanh(c_new)

        # Packed-sequence semantics: freeze state on pad steps (per direction).
        m = mask[t_f] * sel_h + mask[t_b] * inv_sel_h                 # (tb, 2H)
        h = m * h_new + (1.0 - m) * h
        c = m * c_new + (1.0 - m) * c

    # ---- 3. Linear head, lane-dense (padded) output --------------------------------
    out_ref[...] = (jnp.dot(h.astype(mm_dtype), wout_ref[...],
                            preferred_element_type=jnp.float32) + bout_ref[...])


# ---------------------------------------------------------------------------
# Wrapper
# ---------------------------------------------------------------------------
def lstm_text_forward(x_tokens, params, *, matmul_dtype=jnp.float32, block_b=32):
    """x_tokens: (B, T) int32 token ids (pad = 0). Returns (B, C) f32 logits."""
    assert block_b % 8 == 0
    f32 = jnp.float32
    emb_table = params["embed"]
    B, T = x_tokens.shape
    D = emb_table.shape[1]
    H = params["whh_f"].shape[-1]
    C = params["bout"].shape[-1]
    H2 = 2 * H
    G = 8 * H                                   # fused gate width (4 gates x 2 dirs)
    Cp = ((C + 127) // 128) * 128               # lane-dense output

    # --- batch padding / tiling (parallel grid axis) ---
    Bp = ((B + 7) // 8) * 8
    tb = min(Bp, block_b)
    if Bp % tb:
        Bp = ((Bp + tb - 1) // tb) * tb
    if Bp != B:
        x_tokens = jnp.pad(x_tokens, ((0, Bp - B), (0, 0)))   # pad rows -> length 0

    # --- fused parameter layout (tiny arrays) ---
    # gate-major, direction-interleaved columns: [i_f,i_b,f_f,f_b,g_f,g_b,o_f,o_b]
    def interleave(wf, wb):                     # (4, X, H) x2 -> (X, 8H)
        w = jnp.stack([wf, wb], axis=1)         # (4, 2, X, H)
        w = jnp.transpose(w, (2, 0, 1, 3))      # (X, 4, 2, H)
        return w.reshape(w.shape[0], G)

    wcomb = interleave(params["wih_f"], params["wih_b"])          # (D, 8H)
    bcomb = interleave(params["b_f"], params["b_b"])              # (1, 8H)

    whh_big = jnp.zeros((H2, G), f32)                             # block-diagonal
    for k in range(4):
        whh_big = whh_big.at[:H, 2 * H * k:2 * H * k + H].set(params["whh_f"][k])
        whh_big = whh_big.at[H:, 2 * H * k + H:2 * H * (k + 1)].set(params["whh_b"][k])

    sel_g = ((jnp.arange(G) // H) % 2 == 0).astype(f32)[None, :]  # fwd gate columns
    sel_h = (jnp.arange(H2) < H).astype(f32)[None, :]             # fwd state lanes

    wout_big = jnp.concatenate([params["wout_f"], params["wout_b"]], axis=0)  # (2H, C)
    wout_pad = jnp.zeros((H2, Cp), f32).at[:, :C].set(wout_big)
    bout_pad = jnp.zeros((1, Cp), f32).at[:, :C].set(params["bout"])

    # --- activations: gather straight into time-major layout (no big transpose) ---
    lengths = jnp.sum(x_tokens != 0, axis=1)                                    # (Bp,)
    mask = (jnp.arange(T)[:, None] < lengths[None, :]).astype(f32)[:, :, None]  # (T,Bp,1)
    x_tbd = jnp.take(emb_table, x_tokens.T, axis=0).astype(matmul_dtype)        # (T,Bp,D)

    wcomb = wcomb.astype(matmul_dtype)
    whh_big = whh_big.astype(matmul_dtype)
    wout_pad = wout_pad.astype(matmul_dtype)

    grid = (Bp // tb,)
    out = pl.pallas_call(
        _bilstm_head_kernel,
        out_shape=jax.ShapeDtypeStruct((Bp, Cp), f32),
        grid_spec=pltpu.PrefetchScalarGridSpec(
            num_scalar_prefetch=0,
            grid=grid,
            in_specs=[
                pl.BlockSpec((T, tb, D), lambda i: (0, i, 0)),   # x (time-major)
                pl.BlockSpec((T, tb, 1), lambda i: (0, i, 0)),   # mask
                pl.BlockSpec((D, G),   lambda i: (0, 0)),        # wcomb
                pl.BlockSpec((1, G),   lambda i: (0, 0)),        # bcomb
                pl.BlockSpec((H2, G),  lambda i: (0, 0)),        # whh_big
                pl.BlockSpec((1, G),   lambda i: (0, 0)),        # sel_g
                pl.BlockSpec((1, H2),  lambda i: (0, 0)),        # sel_h
                pl.BlockSpec((H2, Cp), lambda i: (0, 0)),        # wout_pad
                pl.BlockSpec((1, Cp),  lambda i: (0, 0)),        # bout_pad
            ],
            out_specs=pl.BlockSpec((tb, Cp), lambda i: (i, 0)),
        ),
        compiler_params=pltpu.CompilerParams(
            dimension_semantics=("parallel",),
            vmem_limit_bytes=48 * 1024 * 1024,
        ),
    )(x_tbd, mask, wcomb, bcomb, whh_big, sel_g, sel_h, wout_pad, bout_pad)

    return out[:B, :C]


# ---------------------------------------------------------------------------
# Parameters + pure-JAX reference
# ---------------------------------------------------------------------------
def init_params(key, V, D, H, C):
    """Deterministic synthetic parameters matching nn.LSTM / nn.Linear shapes."""
    keys = jax.random.split(key, 11)
    s = 1.0 / jnp.sqrt(jnp.float32(H))

    def u(k, shape, scale):
        return jax.random.uniform(k, shape, jnp.float32, -scale, scale)

    embed = jax.random.normal(keys[0], (V, D), jnp.float32) * 0.1
    embed = embed.at[0].set(0.0)   # padding_idx = 0

    # PyTorch weight_ih_l0 is (4H, D), gate order i,f,g,o; stored per-gate and
    # pre-transposed to (D, H) so the kernel does x @ W.
    wih_f = u(keys[1], (4, D, H), s)
    whh_f = u(keys[2], (4, H, H), s)
    b_f = u(keys[3], (4, 1, H), s) + u(keys[4], (4, 1, H), s)   # b_ih + b_hh
    wih_b = u(keys[5], (4, D, H), s)
    whh_b = u(keys[6], (4, H, H), s)
    b_b = u(keys[7], (4, 1, H), s) + u(keys[8], (4, 1, H), s)

    sw = 1.0 / jnp.sqrt(jnp.float32(2 * H))
    wout = u(keys[9], (2 * H, C), sw)       # Linear(h_dim, C), pre-transposed
    bout = u(keys[10], (1, C), sw)

    return dict(embed=embed,
                wih_f=wih_f, whh_f=whh_f, b_f=b_f,
                wih_b=wih_b, whh_b=whh_b, b_b=b_b,
                wout_f=wout[:H], wout_b=wout[H:], bout=bout)


def reference_forward(x_tokens, params):
    """Pure-JAX reference (same math, unrolled Python loop, per-gate matmuls)."""
    emb = jnp.take(params["embed"], x_tokens, axis=0).astype(jnp.float32)
    B, T = x_tokens.shape
    H = params["whh_f"].shape[-1]
    lengths = jnp.sum(x_tokens != 0, axis=1)

    def run_dir(wih, whh, b, order):
        h = jnp.zeros((B, H), jnp.float32)
        c = jnp.zeros((B, H), jnp.float32)
        for t in order:
            x_t = emb[:, t, :]
            m = (t < lengths).astype(jnp.float32)[:, None]
            g = [x_t @ wih[k] + h @ whh[k] + b[k] for k in range(4)]
            i_g = jax.nn.sigmoid(g[0])
            f_g = jax.nn.sigmoid(g[1])
            g_g = jnp.tanh(g[2])
            o_g = jax.nn.sigmoid(g[3])
            c_new = f_g * c + i_g * g_g
            h_new = o_g * jnp.tanh(c_new)
            h = m * h_new + (1.0 - m) * h
            c = m * c_new + (1.0 - m) * c
        return h

    h_f = run_dir(params["wih_f"], params["whh_f"], params["b_f"], range(T))
    h_b = run_dir(params["wih_b"], params["whh_b"], params["b_b"], range(T - 1, -1, -1))
    return h_f @ params["wout_f"] + h_b @ params["wout_b"] + params["bout"]


# ---------------------------------------------------------------------------
if __name__ == "__main__":
    key = jax.random.PRNGKey(0)
    V, D, H, C = 50, 16, 16, 4      # vocab, embed dim, per-direction hidden (h_dim=32), classes
    B, T = 2, 8

    k_p, k_x = jax.random.split(key)
    params = init_params(k_p, V, D, H, C)

    x = jax.random.randint(k_x, (B, T), 1, V, dtype=jnp.int32)
    x = x.at[1, 5:].set(0)          # trailing padding -> lengths = [8, 5]

    ref = reference_forward(x, params)

    # f32 MXU-operand path (bit-safe everywhere, incl. v5e).
    logits = jax.block_until_ready(lstm_text_forward(x, params))
    assert logits.shape == (B, C)
    assert jnp.allclose(logits, ref, atol=1e-4, rtol=1e-4), (logits, ref)

    # bf16 MXU-operand path (v6e/v7x feedback): bf16 matmul operands, f32 accumulation,
    # all elementwise/state math stays f32.
    logits_bf16 = jax.block_until_ready(
        lstm_text_forward(x, params, matmul_dtype=jnp.bfloat16))
    assert logits_bf16.shape == (B, C)
    assert jnp.allclose(logits_bf16, ref, atol=1e-1, rtol=1e-1), (logits_bf16, ref)

    print("KERNEL_OK")
</pallas_src>

<mosaic_0001>
module attributes {stable_mosaic.version = 11 : i64} {
  func.func @_bilstm_head_kernel(%arg0: i32, %arg1: memref<8x8x16xf32, #tpu.memory_space<vmem>>, %arg2: memref<8x8x1xf32, #tpu.memory_space<vmem>>, %arg3: memref<16x128xf32, #tpu.memory_space<vmem>>, %arg4: memref<1x128xf32, #tpu.memory_space<vmem>>, %arg5: memref<32x128xf32, #tpu.memory_space<vmem>>, %arg6: memref<1x128xf32, #tpu.memory_space<vmem>>, %arg7: memref<1x32xf32, #tpu.memory_space<vmem>>, %arg8: memref<32x128xf32, #tpu.memory_space<vmem>>, %arg9: memref<1x128xf32, #tpu.memory_space<vmem>>, %arg10: memref<8x128xf32, #tpu.memory_space<vmem>>) attributes {dimension_semantics = [#tpu.dimension_semantics<parallel>], iteration_bounds = array<i64: 1>, scalar_prefetch = 0 : i64, scratch_operands = 0 : i64, tpu.core_type = #tpu.core_type<tc>, window_params = [{transform_indices = @transform_0, window_bounds = array<i64: 8, 8, 16>}, {transform_indices = @transform_1, window_bounds = array<i64: 8, 8, 1>}, {pipeline_mode = #tpu.pipeline_mode<synchronous>, transform_indices = @transform_2, window_bounds = array<i64: 16, 128>}, {pipeline_mode = #tpu.pipeline_mode<synchronous>, transform_indices = @transform_3, window_bounds = array<i64: 1, 128>}, {pipeline_mode = #tpu.pipeline_mode<synchronous>, transform_indices = @transform_4, window_bounds = array<i64: 32, 128>}, {pipeline_mode = #tpu.pipeline_mode<synchronous>, transform_indices = @transform_5, window_bounds = array<i64: 1, 128>}, {pipeline_mode = #tpu.pipeline_mode<synchronous>, transform_indices = @transform_6, window_bounds = array<i64: 1, 32>}, {pipeline_mode = #tpu.pipeline_mode<synchronous>, transform_indices = @transform_7, window_bounds = array<i64: 32, 128>}, {pipeline_mode = #tpu.pipeline_mode<synchronous>, transform_indices = @transform_8, window_bounds = array<i64: 1, 128>}, {transform_indices = @transform_9, window_bounds = array<i64: 8, 128>}]} {
    %c0 = arith.constant 0 : index
    %c0_0 = arith.constant 0 : index
    %c0_1 = arith.constant 0 : index
    %0 = vector.load %arg1[%c0, %c0_0, %c0_1] : memref<8x8x16xf32, #tpu.memory_space<vmem>>, vector<8x8x16xf32>
    %1 = vector.shape_cast %0 : vector<8x8x16xf32> to vector<64x16xf32>
    %c0_2 = arith.constant 0 : index
    %c0_3 = arith.constant 0 : index
    %2 = vector.load %arg3[%c0_2, %c0_3] : memref<16x128xf32, #tpu.memory_space<vmem>>, vector<16x128xf32>
    %cst = arith.constant dense<0.000000e+00> : vector<64x128xf32>
    %3 = tpu.matmul %1, %2, %cst {dimension_numbers = #tpu.dot_dimension_numbers<[1], [0], [0], [1], [0, 0, 1, 1], [], []>} : vector<64x16xf32>, vector<16x128xf32>, vector<64x128xf32> -> vector<64x128xf32>
    %c0_4 = arith.constant 0 : index
    %c0_5 = arith.constant 0 : index
    %4 = vector.load %arg4[%c0_4, %c0_5] : memref<1x128xf32, #tpu.memory_space<vmem>>, vector<1x128xf32>
    %5 = vector.broadcast %4 : vector<1x128xf32> to vector<64x128xf32>
    %6 = arith.addf %3, %5 : vector<64x128xf32>
    %c0_6 = arith.constant 0 : index
    %c0_7 = arith.constant 0 : index
    %c0_8 = arith.constant 0 : index
    %7 = vector.load %arg2[%c0_6, %c0_7, %c0_8] : memref<8x8x1xf32, #tpu.memory_space<vmem>>, vector<8x8x1xf32>
    %c0_9 = arith.constant 0 : index
    %c0_10 = arith.constant 0 : index
    %8 = vector.load %arg5[%c0_9, %c0_10] : memref<32x128xf32, #tpu.memory_space<vmem>>, vector<32x128xf32>
    %c0_11 = arith.constant 0 : index
    %c0_12 = arith.constant 0 : index
    %9 = vector.load %arg6[%c0_11, %c0_12] : memref<1x128xf32, #tpu.memory_space<vmem>>, vector<1x128xf32>
    %10 = vector.shape_cast %9 : vector<1x128xf32> to vector<1x128xf32>
    %11 = vector.broadcast %10 : vector<1x128xf32> to vector<8x128xf32>
    %cst_13 = arith.constant 1.000000e+00 : f32
    %12 = vector.broadcast %cst_13 : f32 to vector<8x128xf32>
    %13 = arith.subf %12, %11 : vector<8x128xf32>
    %c0_14 = arith.constant 0 : index
    %c0_15 = arith.constant 0 : index
    %14 = vector.load %arg7[%c0_14, %c0_15] : memref<1x32xf32, #tpu.memory_space<vmem>>, vector<1x32xf32>
    %15 = vector.shape_cast %14 : vector<1x32xf32> to vector<1x32xf32>
    %16 = vector.broadcast %15 : vector<1x32xf32> to vector<8x32xf32>
    %cst_16 = arith.constant 1.000000e+00 : f32
    %17 = vector.broadcast %cst_16 : f32 to vector<8x32xf32>
    %18 = arith.subf %17, %16 : vector<8x32xf32>
    %cst_17 = arith.constant 0.000000e+00 : f32
    %19 = vector.broadcast %cst_17 : f32 to vector<8x32xf32>
    %cst_18 = arith.constant 0.000000e+00 : f32
    %20 = vector.broadcast %cst_18 : f32 to vector<8x32xf32>
    %21 = vector.extract_strided_slice %6 {offsets = [0, 0], sizes = [8, 128], strides = [1, 1]} : vector<64x128xf32> to vector<8x128xf32>
    %22 = vector.extract_strided_slice %6 {offsets = [56, 0], sizes = [8, 128], strides = [1, 1]} : vector<64x128xf32> to vector<8x128xf32>
    %23 = arith.mulf %11, %21 : vector<8x128xf32>
    %24 = arith.mulf %13, %22 : vector<8x128xf32>
    %25 = arith.addf %23, %24 : vector<8x128xf32>
    %cst_19 = arith.constant dense<0.000000e+00> : vector<8x128xf32>
    %26 = tpu.matmul %19, %8, %cst_19 {dimension_numbers = #tpu.dot_dimension_numbers<[1], [0], [0], [1], [0, 0, 1, 1], [], []>} : vector<8x32xf32>, vector<32x128xf32>, vector<8x128xf32> -> vector<8x128xf32>
    %27 = arith.addf %25, %26 : vector<8x128xf32>
    %28 = vector.extract_strided_slice %27 {offsets = [0, 0], sizes = [8, 32], strides = [1, 1]} : vector<8x128xf32> to vector<8x32xf32>
    %29 = arith.negf %28 : vector<8x32xf32>
    %30 = math.exp %29 : vector<8x32xf32>
    %cst_20 = arith.constant 1.000000e+00 : f32
    %31 = vector.broadcast %cst_20 : f32 to vector<8x32xf32>
    %32 = arith.addf %31, %30 : vector<8x32xf32>
    %33 = arith.divf %31, %32 : vector<8x32xf32>
    %34 = vector.extract_strided_slice %27 {offsets = [0, 32], sizes = [8, 32], strides = [1, 1]} : vector<8x128xf32> to vector<8x32xf32>
    %35 = arith.negf %34 : vector<8x32xf32>
    %36 = math.exp %35 : vector<8x32xf32>
    %cst_21 = arith.constant 1.000000e+00 : f32
    %37 = vector.broadcast %cst_21 : f32 to vector<8x32xf32>
    %38 = arith.addf %37, %36 : vector<8x32xf32>
    %39 = arith.divf %37, %38 : vector<8x32xf32>
    %40 = vector.extract_strided_slice %27 {offsets = [0, 64], sizes = [8, 32], strides = [1, 1]} : vector<8x128xf32> to vector<8x32xf32>
    %41 = math.tanh %40 : vector<8x32xf32>
    %42 = vector.extract_strided_slice %27 {offsets = [0, 96], sizes = [8, 32], strides = [1, 1]} : vector<8x128xf32> to vector<8x32xf32>
    %43 = arith.negf %42 : vector<8x32xf32>
    %44 = math.exp %43 : vector<8x32xf32>
    %cst_22 = arith.constant 1.000000e+00 : f32
    %45 = vector.broadcast %cst_22 : f32 to vector<8x32xf32>
    %46 = arith.addf %45, %44 : vector<8x32xf32>
    %47 = arith.divf %45, %46 : vector<8x32xf32>
    %48 = arith.mulf %39, %20 : vector<8x32xf32>
    %49 = arith.mulf %33, %41 : vector<8x32xf32>
    %50 = arith.addf %48, %49 : vector<8x32xf32>
    %51 = math.tanh %50 : vector<8x32xf32>
    %52 = arith.mulf %47, %51 : vector<8x32xf32>
    %53 = vector.extract_strided_slice %7 {offsets = [0, 0, 0], sizes = [1, 8, 1], strides = [1, 1, 1]} : vector<8x8x1xf32> to vector<1x8x1xf32>
    %54 = vector.shape_cast %53 : vector<1x8x1xf32> to vector<8x1xf32>
    %55 = vector.broadcast %54 : vector<8x1xf32> to vector<8x32xf32>
    %56 = arith.mulf %55, %16 : vector<8x32xf32>
    %57 = vector.extract_strided_slice %7 {offsets = [7, 0, 0], sizes = [1, 8, 1], strides = [1, 1, 1]} : vector<8x8x1xf32> to vector<1x8x1xf32>
    %58 = vector.shape_cast %57 : vector<1x8x1xf32> to vector<8x1xf32>
    %59 = vector.broadcast %58 : vector<8x1xf32> to vector<8x32xf32>
    %60 = arith.mulf %59, %18 : vector<8x32xf32>
    %61 = arith.addf %56, %60 : vector<8x32xf32>
    %62 = arith.mulf %61, %52 : vector<8x32xf32>
    %cst_23 = arith.constant 1.000000e+00 : f32
    %63 = vector.broadcast %cst_23 : f32 to vector<8x32xf32>
    %64 = arith.subf %63, %61 : vector<8x32xf32>
    %65 = arith.mulf %64, %19 : vector<8x32xf32>
    %66 = arith.addf %62, %65 : vector<8x32xf32>
    %67 = arith.mulf %61, %50 : vector<8x32xf32>
    %cst_24 = arith.constant 1.000000e+00 : f32
    %68 = vector.broadcast %cst_24 : f32 to vector<8x32xf32>
    %69 = arith.subf %68, %61 : vector<8x32xf32>
    %70 = arith.mulf %69, %20 : vector<8x32xf32>
    %71 = arith.addf %67, %70 : vector<8x32xf32>
    %72 = vector.extract_strided_slice %6 {offsets = [8, 0], sizes = [8, 128], strides = [1, 1]} : vector<64x128xf32> to vector<8x128xf32>
    %73 = vector.extract_strided_slice %6 {offsets = [48, 0], sizes = [8, 128], strides = [1, 1]} : vector<64x128xf32> to vector<8x128xf32>
    %74 = arith.mulf %11, %72 : vector<8x128xf32>
    %75 = arith.mulf %13, %73 : vector<8x128xf32>
    %76 = arith.addf %74, %75 : vector<8x128xf32>
    %cst_25 = arith.constant dense<0.000000e+00> : vector<8x128xf32>
    %77 = tpu.matmul %66, %8, %cst_25 {dimension_numbers = #tpu.dot_dimension_numbers<[1], [0], [0], [1], [0, 0, 1, 1], [], []>} : vector<8x32xf32>, vector<32x128xf32>, vector<8x128xf32> -> vector<8x128xf32>
    %78 = arith.addf %76, %77 : vector<8x128xf32>
    %79 = vector.extract_strided_slice %78 {offsets = [0, 0], sizes = [8, 32], strides = [1, 1]} : vector<8x128xf32> to vector<8x32xf32>
    %80 = arith.negf %79 : vector<8x32xf32>
    %81 = math.exp %80 : vector<8x32xf32>
    %cst_26 = arith.constant 1.000000e+00 : f32
    %82 = vector.broadcast %cst_26 : f32 to vector<8x32xf32>
    %83 = arith.addf %82, %81 : vector<8x32xf32>
    %84 = arith.divf %82, %83 : vector<8x32xf32>
    %85 = vector.extract_strided_slice %78 {offsets = [0, 32], sizes = [8, 32], strides = [1, 1]} : vector<8x128xf32> to vector<8x32xf32>
    %86 = arith.negf %85 : vector<8x32xf32>
    %87 = math.exp %86 : vector<8x32xf32>
    %cst_27 = arith.constant 1.000000e+00 : f32
    %88 = vector.broadcast %cst_27 : f32 to vector<8x32xf32>
    %89 = arith.addf %88, %87 : vector<8x32xf32>
    %90 = arith.divf %88, %89 : vector<8x32xf32>
    %91 = vector.extract_strided_slice %78 {offsets = [0, 64], sizes = [8, 32], strides = [1, 1]} : vector<8x128xf32> to vector<8x32xf32>
    %92 = math.tanh %91 : vector<8x32xf32>
    %93 = vector.extract_strided_slice %78 {offsets = [0, 96], sizes = [8, 32], strides = [1, 1]} : vector<8x128xf32> to vector<8x32xf32>
    %94 = arith.negf %93 : vector<8x32xf32>
    %95 = math.exp %94 : vector<8x32xf32>
    %cst_28 = arith.constant 1.000000e+00 : f32
    %96 = vector.broadcast %cst_28 : f32 to vector<8x32xf32>
    %97 = arith.addf %96, %95 : vector<8x32xf32>
    %98 = arith.divf %96, %97 : vector<8x32xf32>
    %99 = arith.mulf %90, %71 : vector<8x32xf32>
    %100 = arith.mulf %84, %92 : vector<8x32xf32>
    %101 = arith.addf %99, %100 : vector<8x32xf32>
    %102 = math.tanh %101 : vector<8x32xf32>
    %103 = arith.mulf %98, %102 : vector<8x32xf32>
    %104 = vector.extract_strided_slice %7 {offsets = [1, 0, 0], sizes = [1, 8, 1], strides = [1, 1, 1]} : vector<8x8x1xf32> to vector<1x8x1xf32>
    %105 = vector.shape_cast %104 : vector<1x8x1xf32> to vector<8x1xf32>
    %106 = vector.broadcast %105 : vector<8x1xf32> to vector<8x32xf32>
    %107 = arith.mulf %106, %16 : vector<8x32xf32>
    %108 = vector.extract_strided_slice %7 {offsets = [6, 0, 0], sizes = [1, 8, 1], strides = [1, 1, 1]} : vector<8x8x1xf32> to vector<1x8x1xf32>
    %109 = vector.shape_cast %108 : vector<1x8x1xf32> to vector<8x1xf32>
    %110 = vector.broadcast %109 : vector<8x1xf32> to vector<8x32xf32>
    %111 = arith.mulf %110, %18 : vector<8x32xf32>
    %112 = arith.addf %107, %111 : vector<8x32xf32>
    %113 = arith.mulf %112, %103 : vector<8x32xf32>
    %cst_29 = arith.constant 1.000000e+00 : f32
    %114 = vector.broadcast %cst_29 : f32 to vector<8x32xf32>
    %115 = arith.subf %114, %112 : vector<8x32xf32>
    %116 = arith.mulf %115, %66 : vector<8x32xf32>
    %117 = arith.addf %113, %116 : vector<8x32xf32>
    %118 = arith.mulf %112, %101 : vector<8x32xf32>
    %cst_30 = arith.constant 1.000000e+00 : f32
    %119 = vector.broadcast %cst_30 : f32 to vector<8x32xf32>
    %120 = arith.subf %119, %112 : vector<8x32xf32>
    %121 = arith.mulf %120, %71 : vector<8x32xf32>
    %122 = arith.addf %118, %121 : vector<8x32xf32>
    %123 = vector.extract_strided_slice %6 {offsets = [16, 0], sizes = [8, 128], strides = [1, 1]} : vector<64x128xf32> to vector<8x128xf32>
    %124 = vector.extract_strided_slice %6 {offsets = [40, 0], sizes = [8, 128], strides = [1, 1]} : vector<64x128xf32> to vector<8x128xf32>
    %125 = arith.mulf %11, %123 : vector<8x128xf32>
    %126 = arith.mulf %13, %124 : vector<8x128xf32>
    %127 = arith.addf %125, %126 : vector<8x128xf32>
    %cst_31 = arith.constant dense<0.000000e+00> : vector<8x128xf32>
    %128 = tpu.matmul %117, %8, %cst_31 {dimension_numbers = #tpu.dot_dimension_numbers<[1], [0], [0], [1], [0, 0, 1, 1], [], []>} : vector<8x32xf32>, vector<32x128xf32>, vector<8x128xf32> -> vector<8x128xf32>
    %129 = arith.addf %127, %128 : vector<8x128xf32>
    %130 = vector.extract_strided_slice %129 {offsets = [0, 0], sizes = [8, 32], strides = [1, 1]} : vector<8x128xf32> to vector<8x32xf32>
    %131 = arith.negf %130 : vector<8x32xf32>
    %132 = math.exp %131 : vector<8x32xf32>
    %cst_32 = arith.constant 1.000000e+00 : f32
    %133 = vector.broadcast %cst_32 : f32 to vector<8x32xf32>
    %134 = arith.addf %133, %132 : vector<8x32xf32>
    %135 = arith.divf %133, %134 : vector<8x32xf32>
    %136 = vector.extract_strided_slice %129 {offsets = [0, 32], sizes = [8, 32], strides = [1, 1]} : vector<8x128xf32> to vector<8x32xf32>
    %137 = arith.negf %136 : vector<8x32xf32>
    %138 = math.exp %137 : vector<8x32xf32>
    %cst_33 = arith.constant 1.000000e+00 : f32
    %139 = vector.broadcast %cst_33 : f32 to vector<8x32xf32>
    %140 = arith.addf %139, %138 : vector<8x32xf32>
    %141 = arith.divf %139, %140 : vector<8x32xf32>
    %142 = vector.extract_strided_slice %129 {offsets = [0, 64], sizes = [8, 32], strides = [1, 1]} : vector<8x128xf32> to vector<8x32xf32>
    %143 = math.tanh %142 : vector<8x32xf32>
    %144 = vector.extract_strided_slice %129 {offsets = [0, 96], sizes = [8, 32], strides = [1, 1]} : vector<8x128xf32> to vector<8x32xf32>
    %145 = arith.negf %144 : vector<8x32xf32>
    %146 = math.exp %145 : vector<8x32xf32>
    %cst_34 = arith.constant 1.000000e+00 : f32
    %147 = vector.broadcast %cst_34 : f32 to vector<8x32xf32>
    %148 = arith.addf %147, %146 : vector<8x32xf32>
    %149 = arith.divf %147, %148 : vector<8x32xf32>
    %150 = arith.mulf %141, %122 : vector<8x32xf32>
    %151 = arith.mulf %135, %143 : vector<8x32xf32>
    %152 = arith.addf %150, %151 : vector<8x32xf32>
    %153 = math.tanh %152 : vector<8x32xf32>
    %154 = arith.mulf %149, %153 : vector<8x32xf32>
    %155 = vector.extract_strided_slice %7 {offsets = [2, 0, 0], sizes = [1, 8, 1], strides = [1, 1, 1]} : vector<8x8x1xf32> to vector<1x8x1xf32>
    %156 = vector.shape_cast %155 : vector<1x8x1xf32> to vector<8x1xf32>
    %157 = vector.broadcast %156 : vector<8x1xf32> to vector<8x32xf32>
    %158 = arith.mulf %157, %16 : vector<8x32xf32>
    %159 = vector.extract_strided_slice %7 {offsets = [5, 0, 0], sizes = [1, 8, 1], strides = [1, 1, 1]} : vector<8x8x1xf32> to vector<1x8x1xf32>
    %160 = vector.shape_cast %159 : vector<1x8x1xf32> to vector<8x1xf32>
    %161 = vector.broadcast %160 : vector<8x1xf32> to vector<8x32xf32>
    %162 = arith.mulf %161, %18 : vector<8x32xf32>
    %163 = arith.addf %158, %162 : vector<8x32xf32>
    %164 = arith.mulf %163, %154 : vector<8x32xf32>
    %cst_35 = arith.constant 1.000000e+00 : f32
    %165 = vector.broadcast %cst_35 : f32 to vector<8x32xf32>
    %166 = arith.subf %165, %163 : vector<8x32xf32>
    %167 = arith.mulf %166, %117 : vector<8x32xf32>
    %168 = arith.addf %164, %167 : vector<8x32xf32>
    %169 = arith.mulf %163, %152 : vector<8x32xf32>
    %cst_36 = arith.constant 1.000000e+00 : f32
    %170 = vector.broadcast %cst_36 : f32 to vector<8x32xf32>
    %171 = arith.subf %170, %163 : vector<8x32xf32>
    %172 = arith.mulf %171, %122 : vector<8x32xf32>
    %173 = arith.addf %169, %172 : vector<8x32xf32>
    %174 = vector.extract_strided_slice %6 {offsets = [24, 0], sizes = [8, 128], strides = [1, 1]} : vector<64x128xf32> to vector<8x128xf32>
    %175 = vector.extract_strided_slice %6 {offsets = [32, 0], sizes = [8, 128], strides = [1, 1]} : vector<64x128xf32> to vector<8x128xf32>
    %176 = arith.mulf %11, %174 : vector<8x128xf32>
    %177 = arith.mulf %13, %175 : vector<8x128xf32>
    %178 = arith.addf %176, %177 : vector<8x128xf32>
    %cst_37 = arith.constant dense<0.000000e+00> : vector<8x128xf32>
    %179 = tpu.matmul %168, %8, %cst_37 {dimension_numbers = #tpu.dot_dimension_numbers<[1], [0], [0], [1], [0, 0, 1, 1], [], []>} : vector<8x32xf32>, vector<32x128xf32>, vector<8x128xf32> -> vector<8x128xf32>
    %180 = arith.addf %178, %179 : vector<8x128xf32>
    %181 = vector.extract_strided_slice %180 {offsets = [0, 0], sizes = [8, 32], strides = [1, 1]} : vector<8x128xf32> to vector<8x32xf32>
    %182 = arith.negf %181 : vector<8x32xf32>
    %183 = math.exp %182 : vector<8x32xf32>
    %cst_38 = arith.constant 1.000000e+00 : f32
    %184 = vector.broadcast %cst_38 : f32 to vector<8x32xf32>
    %185 = arith.addf %184, %183 : vector<8x32xf32>
    %186 = arith.divf %184, %185 : vector<8x32xf32>
    %187 = vector.extract_strided_slice %180 {offsets = [0, 32], sizes = [8, 32], strides = [1, 1]} : vector<8x128xf32> to vector<8x32xf32>
    %188 = arith.negf %187 : vector<8x32xf32>
    %189 = math.exp %188 : vector<8x32xf32>
    %cst_39 = arith.constant 1.000000e+00 : f32
    %190 = vector.broadcast %cst_39 : f32 to vector<8x32xf32>
    %191 = arith.addf %190, %189 : vector<8x32xf32>
    %192 = arith.divf %190, %191 : vector<8x32xf32>
    %193 = vector.extract_strided_slice %180 {offsets = [0, 64], sizes = [8, 32], strides = [1, 1]} : vector<8x128xf32> to vector<8x32xf32>
    %194 = math.tanh %193 : vector<8x32xf32>
    %195 = vector.extract_strided_slice %180 {offsets = [0, 96], sizes = [8, 32], strides = [1, 1]} : vector<8x128xf32> to vector<8x32xf32>
    %196 = arith.negf %195 : vector<8x32xf32>
    %197 = math.exp %196 : vector<8x32xf32>
    %cst_40 = arith.constant 1.000000e+00 : f32
    %198 = vector.broadcast %cst_40 : f32 to vector<8x32xf32>
    %199 = arith.addf %198, %197 : vector<8x32xf32>
    %200 = arith.divf %198, %199 : vector<8x32xf32>
    %201 = arith.mulf %192, %173 : vector<8x32xf32>
    %202 = arith.mulf %186, %194 : vector<8x32xf32>
    %203 = arith.addf %201, %202 : vector<8x32xf32>
    %204 = math.tanh %203 : vector<8x32xf32>
    %205 = arith.mulf %200, %204 : vector<8x32xf32>
    %206 = vector.extract_strided_slice %7 {offsets = [3, 0, 0], sizes = [1, 8, 1], strides = [1, 1, 1]} : vector<8x8x1xf32> to vector<1x8x1xf32>
    %207 = vector.shape_cast %206 : vector<1x8x1xf32> to vector<8x1xf32>
    %208 = vector.broadcast %207 : vector<8x1xf32> to vector<8x32xf32>
    %209 = arith.mulf %208, %16 : vector<8x32xf32>
    %210 = vector.extract_strided_slice %7 {offsets = [4, 0, 0], sizes = [1, 8, 1], strides = [1, 1, 1]} : vector<8x8x1xf32> to vector<1x8x1xf32>
    %211 = vector.shape_cast %210 : vector<1x8x1xf32> to vector<8x1xf32>
    %212 = vector.broadcast %211 : vector<8x1xf32> to vector<8x32xf32>
    %213 = arith.mulf %212, %18 : vector<8x32xf32>
    %214 = arith.addf %209, %213 : vector<8x32xf32>
    %215 = arith.mulf %214, %205 : vector<8x32xf32>
    %cst_41 = arith.constant 1.000000e+00 : f32
    %216 = vector.broadcast %cst_41 : f32 to vector<8x32xf32>
    %217 = arith.subf %216, %214 : vector<8x32xf32>
    %218 = arith.mulf %217, %168 : vector<8x32xf32>
    %219 = arith.addf %215, %218 : vector<8x32xf32>
    %220 = arith.mulf %214, %203 : vector<8x32xf32>
    %cst_42 = arith.constant 1.000000e+00 : f32
    %221 = vector.broadcast %cst_42 : f32 to vector<8x32xf32>
    %222 = arith.subf %221, %214 : vector<8x32xf32>
    %223 = arith.mulf %222, %173 : vector<8x32xf32>
    %224 = arith.addf %220, %223 : vector<8x32xf32>
    %225 = vector.extract_strided_slice %6 {offsets = [32, 0], sizes = [8, 128], strides = [1, 1]} : vector<64x128xf32> to vector<8x128xf32>
    %226 = vector.extract_strided_slice %6 {offsets = [24, 0], sizes = [8, 128], strides = [1, 1]} : vector<64x128xf32> to vector<8x128xf32>
    %227 = arith.mulf %11, %225 : vector<8x128xf32>
    %228 = arith.mulf %13, %226 : vector<8x128xf32>
    %229 = arith.addf %227, %228 : vector<8x128xf32>
    %cst_43 = arith.constant dense<0.000000e+00> : vector<8x128xf32>
    %230 = tpu.matmul %219, %8, %cst_43 {dimension_numbers = #tpu.dot_dimension_numbers<[1], [0], [0], [1], [0, 0, 1, 1], [], []>} : vector<8x32xf32>, vector<32x128xf32>, vector<8x128xf32> -> vector<8x128xf32>
    %231 = arith.addf %229, %230 : vector<8x128xf32>
    %232 = vector.extract_strided_slice %231 {offsets = [0, 0], sizes = [8, 32], strides = [1, 1]} : vector<8x128xf32> to vector<8x32xf32>
    %233 = arith.negf %232 : vector<8x32xf32>
    %234 = math.exp %233 : vector<8x32xf32>
    %cst_44 = arith.constant 1.000000e+00 : f32
    %235 = vector.broadcast %cst_44 : f32 to vector<8x32xf32>
    %236 = arith.addf %235, %234 : vector<8x32xf32>
    %237 = arith.divf %235, %236 : vector<8x32xf32>
    %238 = vector.extract_strided_slice %231 {offsets = [0, 32], sizes = [8, 32], strides = [1, 1]} : vector<8x128xf32> to vector<8x32xf32>
    %239 = arith.negf %238 : vector<8x32xf32>
    %240 = math.exp %239 : vector<8x32xf32>
    %cst_45 = arith.constant 1.000000e+00 : f32
    %241 = vector.broadcast %cst_45 : f32 to vector<8x32xf32>
    %242 = arith.addf %241, %240 : vector<8x32xf32>
    %243 = arith.divf %241, %242 : vector<8x32xf32>
    %244 = vector.extract_strided_slice %231 {offsets = [0, 64], sizes = [8, 32], strides = [1, 1]} : vector<8x128xf32> to vector<8x32xf32>
    %245 = math.tanh %244 : vector<8x32xf32>
    %246 = vector.extract_strided_slice %231 {offsets = [0, 96], sizes = [8, 32], strides = [1, 1]} : vector<8x128xf32> to vector<8x32xf32>
    %247 = arith.negf %246 : vector<8x32xf32>
    %248 = math.exp %247 : vector<8x32xf32>
    %cst_46 = arith.constant 1.000000e+00 : f32
    %249 = vector.broadcast %cst_46 : f32 to vector<8x32xf32>
    %250 = arith.addf %249, %248 : vector<8x32xf32>
    %251 = arith.divf %249, %250 : vector<8x32xf32>
    %252 = arith.mulf %243, %224 : vector<8x32xf32>
    %253 = arith.mulf %237, %245 : vector<8x32xf32>
    %254 = arith.addf %252, %253 : vector<8x32xf32>
    %255 = math.tanh %254 : vector<8x32xf32>
    %256 = arith.mulf %251, %255 : vector<8x32xf32>
    %257 = vector.extract_strided_slice %7 {offsets = [4, 0, 0], sizes = [1, 8, 1], strides = [1, 1, 1]} : vector<8x8x1xf32> to vector<1x8x1xf32>
    %258 = vector.shape_cast %257 : vector<1x8x1xf32> to vector<8x1xf32>
    %259 = vector.broadcast %258 : vector<8x1xf32> to vector<8x32xf32>
    %260 = arith.mulf %259, %16 : vector<8x32xf32>
    %261 = vector.extract_strided_slice %7 {offsets = [3, 0, 0], sizes = [1, 8, 1], strides = [1, 1, 1]} : vector<8x8x1xf32> to vector<1x8x1xf32>
    %262 = vector.shape_cast %261 : vector<1x8x1xf32> to vector<8x1xf32>
    %263 = vector.broadcast %262 : vector<8x1xf32> to vector<8x32xf32>
    %264 = arith.mulf %263, %18 : vector<8x32xf32>
    %265 = arith.addf %260, %264 : vector<8x32xf32>
    %266 = arith.mulf %265, %256 : vector<8x32xf32>
    %cst_47 = arith.constant 1.000000e+00 : f32
    %267 = vector.broadcast %cst_47 : f32 to vector<8x32xf32>
    %268 = arith.subf %267, %265 : vector<8x32xf32>
    %269 = arith.mulf %268, %219 : vector<8x32xf32>
    %270 = arith.addf %266, %269 : vector<8x32xf32>
    %271 = arith.mulf %265, %254 : vector<8x32xf32>
    %cst_48 = arith.constant 1.000000e+00 : f32
    %272 = vector.broadcast %cst_48 : f32 to vector<8x32xf32>
    %273 = arith.subf %272, %265 : vector<8x32xf32>
    %274 = arith.mulf %273, %224 : vector<8x32xf32>
    %275 = arith.addf %271, %274 : vector<8x32xf32>
    %276 = vector.extract_strided_slice %6 {offsets = [40, 0], sizes = [8, 128], strides = [1, 1]} : vector<64x128xf32> to vector<8x128xf32>
    %277 = vector.extract_strided_slice %6 {offsets = [16, 0], sizes = [8, 128], strides = [1, 1]} : vector<64x128xf32> to vector<8x128xf32>
    %278 = arith.mulf %11, %276 : vector<8x128xf32>
    %279 = arith.mulf %13, %277 : vector<8x128xf32>
    %280 = arith.addf %278, %279 : vector<8x128xf32>
    %cst_49 = arith.constant dense<0.000000e+00> : vector<8x128xf32>
    %281 = tpu.matmul %270, %8, %cst_49 {dimension_numbers = #tpu.dot_dimension_numbers<[1], [0], [0], [1], [0, 0, 1, 1], [], []>} : vector<8x32xf32>, vector<32x128xf32>, vector<8x128xf32> -> vector<8x128xf32>
    %282 = arith.addf %280, %281 : vector<8x128xf32>
    %283 = vector.extract_strided_slice %282 {offsets = [0, 0], sizes = [8, 32], strides = [1, 1]} : vector<8x128xf32> to vector<8x32xf32>
    %284 = arith.negf %283 : vector<8x32xf32>
    %285 = math.exp %284 : vector<8x32xf32>
    %cst_50 = arith.constant 1.000000e+00 : f32
    %286 = vector.broadcast %cst_50 : f32 to vector<8x32xf32>
    %287 = arith.addf %286, %285 : vector<8x32xf32>
    %288 = arith.divf %286, %287 : vector<8x32xf32>
    %289 = vector.extract_strided_slice %282 {offsets = [0, 32], sizes = [8, 32], strides = [1, 1]} : vector<8x128xf32> to vector<8x32xf32>
    %290 = arith.negf %289 : vector<8x32xf32>
    %291 = math.exp %290 : vector<8x32xf32>
    %cst_51 = arith.constant 1.000000e+00 : f32
    %292 = vector.broadcast %cst_51 : f32 to vector<8x32xf32>
    %293 = arith.addf %292, %291 : vector<8x32xf32>
    %294 = arith.divf %292, %293 : vector<8x32xf32>
    %295 = vector.extract_strided_slice %282 {offsets = [0, 64], sizes = [8, 32], strides = [1, 1]} : vector<8x128xf32> to vector<8x32xf32>
    %296 = math.tanh %295 : vector<8x32xf32>
    %297 = vector.extract_strided_slice %282 {offsets = [0, 96], sizes = [8, 32], strides = [1, 1]} : vector<8x128xf32> to vector<8x32xf32>
    %298 = arith.negf %297 : vector<8x32xf32>
    %299 = math.exp %298 : vector<8x32xf32>
    %cst_52 = arith.constant 1.000000e+00 : f32
    %300 = vector.broadcast %cst_52 : f32 to vector<8x32xf32>
    %301 = arith.addf %300, %299 : vector<8x32xf32>
    %302 = arith.divf %300, %301 : vector<8x32xf32>
    %303 = arith.mulf %294, %275 : vector<8x32xf32>
    %304 = arith.mulf %288, %296 : vector<8x32xf32>
    %305 = arith.addf %303, %304 : vector<8x32xf32>
    %306 = math.tanh %305 : vector<8x32xf32>
    %307 = arith.mulf %302, %306 : vector<8x32xf32>
    %308 = vector.extract_strided_slice %7 {offsets = [5, 0, 0], sizes = [1, 8, 1], strides = [1, 1, 1]} : vector<8x8x1xf32> to vector<1x8x1xf32>
    %309 = vector.shape_cast %308 : vector<1x8x1xf32> to vector<8x1xf32>
    %310 = vector.broadcast %309 : vector<8x1xf32> to vector<8x32xf32>
    %311 = arith.mulf %310, %16 : vector<8x32xf32>
    %312 = vector.extract_strided_slice %7 {offsets = [2, 0, 0], sizes = [1, 8, 1], strides = [1, 1, 1]} : vector<8x8x1xf32> to vector<1x8x1xf32>
    %313 = vector.shape_cast %312 : vector<1x8x1xf32> to vector<8x1xf32>
    %314 = vector.broadcast %313 : vector<8x1xf32> to vector<8x32xf32>
    %315 = arith.mulf %314, %18 : vector<8x32xf32>
    %316 = arith.addf %311, %315 : vector<8x32xf32>
    %317 = arith.mulf %316, %307 : vector<8x32xf32>
    %cst_53 = arith.constant 1.000000e+00 : f32
    %318 = vector.broadcast %cst_53 : f32 to vector<8x32xf32>
    %319 = arith.subf %318, %316 : vector<8x32xf32>
    %320 = arith.mulf %319, %270 : vector<8x32xf32>
    %321 = arith.addf %317, %320 : vector<8x32xf32>
    %322 = arith.mulf %316, %305 : vector<8x32xf32>
    %cst_54 = arith.constant 1.000000e+00 : f32
    %323 = vector.broadcast %cst_54 : f32 to vector<8x32xf32>
    %324 = arith.subf %323, %316 : vector<8x32xf32>
    %325 = arith.mulf %324, %275 : vector<8x32xf32>
    %326 = arith.addf %322, %325 : vector<8x32xf32>
    %327 = vector.extract_strided_slice %6 {offsets = [48, 0], sizes = [8, 128], strides = [1, 1]} : vector<64x128xf32> to vector<8x128xf32>
    %328 = vector.extract_strided_slice %6 {offsets = [8, 0], sizes = [8, 128], strides = [1, 1]} : vector<64x128xf32> to vector<8x128xf32>
    %329 = arith.mulf %11, %327 : vector<8x128xf32>
    %330 = arith.mulf %13, %328 : vector<8x128xf32>
    %331 = arith.addf %329, %330 : vector<8x128xf32>
    %cst_55 = arith.constant dense<0.000000e+00> : vector<8x128xf32>
    %332 = tpu.matmul %321, %8, %cst_55 {dimension_numbers = #tpu.dot_dimension_numbers<[1], [0], [0], [1], [0, 0, 1, 1], [], []>} : vector<8x32xf32>, vector<32x128xf32>, vector<8x128xf32> -> vector<8x128xf32>
    %333 = arith.addf %331, %332 : vector<8x128xf32>
    %334 = vector.extract_strided_slice %333 {offsets = [0, 0], sizes = [8, 32], strides = [1, 1]} : vector<8x128xf32> to vector<8x32xf32>
    %335 = arith.negf %334 : vector<8x32xf32>
    %336 = math.exp %335 : vector<8x32xf32>
    %cst_56 = arith.constant 1.000000e+00 : f32
    %337 = vector.broadcast %cst_56 : f32 to vector<8x32xf32>
    %338 = arith.addf %337, %336 : vector<8x32xf32>
    %339 = arith.divf %337, %338 : vector<8x32xf32>
    %340 = vector.extract_strided_slice %333 {offsets = [0, 32], sizes = [8, 32], strides = [1, 1]} : vector<8x128xf32> to vector<8x32xf32>
    %341 = arith.negf %340 : vector<8x32xf32>
    %342 = math.exp %341 : vector<8x32xf32>
    %cst_57 = arith.constant 1.000000e+00 : f32
    %343 = vector.broadcast %cst_57 : f32 to vector<8x32xf32>
    %344 = arith.addf %343, %342 : vector<8x32xf32>
    %345 = arith.divf %343, %344 : vector<8x32xf32>
    %346 = vector.extract_strided_slice %333 {offsets = [0, 64], sizes = [8, 32], strides = [1, 1]} : vector<8x128xf32> to vector<8x32xf32>
    %347 = math.tanh %346 : vector<8x32xf32>
    %348 = vector.extract_strided_slice %333 {offsets = [0, 96], sizes = [8, 32], strides = [1, 1]} : vector<8x128xf32> to vector<8x32xf32>
    %349 = arith.negf %348 : vector<8x32xf32>
    %350 = math.exp %349 : vector<8x32xf32>
    %cst_58 = arith.constant 1.000000e+00 : f32
    %351 = vector.broadcast %cst_58 : f32 to vector<8x32xf32>
    %352 = arith.addf %351, %350 : vector<8x32xf32>
    %353 = arith.divf %351, %352 : vector<8x32xf32>
    %354 = arith.mulf %345, %326 : vector<8x32xf32>
    %355 = arith.mulf %339, %347 : vector<8x32xf32>
    %356 = arith.addf %354, %355 : vector<8x32xf32>
    %357 = math.tanh %356 : vector<8x32xf32>
    %358 = arith.mulf %353, %357 : vector<8x32xf32>
    %359 = vector.extract_strided_slice %7 {offsets = [6, 0, 0], sizes = [1, 8, 1], strides = [1, 1, 1]} : vector<8x8x1xf32> to vector<1x8x1xf32>
    %360 = vector.shape_cast %359 : vector<1x8x1xf32> to vector<8x1xf32>
    %361 = vector.broadcast %360 : vector<8x1xf32> to vector<8x32xf32>
    %362 = arith.mulf %361, %16 : vector<8x32xf32>
    %363 = vector.extract_strided_slice %7 {offsets = [1, 0, 0], sizes = [1, 8, 1], strides = [1, 1, 1]} : vector<8x8x1xf32> to vector<1x8x1xf32>
    %364 = vector.shape_cast %363 : vector<1x8x1xf32> to vector<8x1xf32>
    %365 = vector.broadcast %364 : vector<8x1xf32> to vector<8x32xf32>
    %366 = arith.mulf %365, %18 : vector<8x32xf32>
    %367 = arith.addf %362, %366 : vector<8x32xf32>
    %368 = arith.mulf %367, %358 : vector<8x32xf32>
    %cst_59 = arith.constant 1.000000e+00 : f32
    %369 = vector.broadcast %cst_59 : f32 to vector<8x32xf32>
    %370 = arith.subf %369, %367 : vector<8x32xf32>
    %371 = arith.mulf %370, %321 : vector<8x32xf32>
    %372 = arith.addf %368, %371 : vector<8x32xf32>
    %373 = arith.mulf %367, %356 : vector<8x32xf32>
    %cst_60 = arith.constant 1.000000e+00 : f32
    %374 = vector.broadcast %cst_60 : f32 to vector<8x32xf32>
    %375 = arith.subf %374, %367 : vector<8x32xf32>
    %376 = arith.mulf %375, %326 : vector<8x32xf32>
    %377 = arith.addf %373, %376 : vector<8x32xf32>
    %378 = vector.extract_strided_slice %6 {offsets = [56, 0], sizes = [8, 128], strides = [1, 1]} : vector<64x128xf32> to vector<8x128xf32>
    %379 = vector.extract_strided_slice %6 {offsets = [0, 0], sizes = [8, 128], strides = [1, 1]} : vector<64x128xf32> to vector<8x128xf32>
    %380 = arith.mulf %11, %378 : vector<8x128xf32>
    %381 = arith.mulf %13, %379 : vector<8x128xf32>
    %382 = arith.addf %380, %381 : vector<8x128xf32>
    %cst_61 = arith.constant dense<0.000000e+00> : vector<8x128xf32>
    %383 = tpu.matmul %372, %8, %cst_61 {dimension_numbers = #tpu.dot_dimension_numbers<[1], [0], [0], [1], [0, 0, 1, 1], [], []>} : vector<8x32xf32>, vector<32x128xf32>, vector<8x128xf32> -> vector<8x128xf32>
    %384 = arith.addf %382, %383 : vector<8x128xf32>
    %385 = vector.extract_strided_slice %384 {offsets = [0, 0], sizes = [8, 32], strides = [1, 1]} : vector<8x128xf32> to vector<8x32xf32>
    %386 = arith.negf %385 : vector<8x32xf32>
    %387 = math.exp %386 : vector<8x32xf32>
    %cst_62 = arith.constant 1.000000e+00 : f32
    %388 = vector.broadcast %cst_62 : f32 to vector<8x32xf32>
    %389 = arith.addf %388, %387 : vector<8x32xf32>
    %390 = arith.divf %388, %389 : vector<8x32xf32>
    %391 = vector.extract_strided_slice %384 {offsets = [0, 32], sizes = [8, 32], strides = [1, 1]} : vector<8x128xf32> to vector<8x32xf32>
    %392 = arith.negf %391 : vector<8x32xf32>
    %393 = math.exp %392 : vector<8x32xf32>
    %cst_63 = arith.constant 1.000000e+00 : f32
    %394 = vector.broadcast %cst_63 : f32 to vector<8x32xf32>
    %395 = arith.addf %394, %393 : vector<8x32xf32>
    %396 = arith.divf %394, %395 : vector<8x32xf32>
    %397 = vector.extract_strided_slice %384 {offsets = [0, 64], sizes = [8, 32], strides = [1, 1]} : vector<8x128xf32> to vector<8x32xf32>
    %398 = math.tanh %397 : vector<8x32xf32>
    %399 = vector.extract_strided_slice %384 {offsets = [0, 96], sizes = [8, 32], strides = [1, 1]} : vector<8x128xf32> to vector<8x32xf32>
    %400 = arith.negf %399 : vector<8x32xf32>
    %401 = math.exp %400 : vector<8x32xf32>
    %cst_64 = arith.constant 1.000000e+00 : f32
    %402 = vector.broadcast %cst_64 : f32 to vector<8x32xf32>
    %403 = arith.addf %402, %401 : vector<8x32xf32>
    %404 = arith.divf %402, %403 : vector<8x32xf32>
    %405 = arith.mulf %396, %377 : vector<8x32xf32>
    %406 = arith.mulf %390, %398 : vector<8x32xf32>
    %407 = arith.addf %405, %406 : vector<8x32xf32>
    %408 = math.tanh %407 : vector<8x32xf32>
    %409 = arith.mulf %404, %408 : vector<8x32xf32>
    %410 = vector.extract_strided_slice %7 {offsets = [7, 0, 0], sizes = [1, 8, 1], strides = [1, 1, 1]} : vector<8x8x1xf32> to vector<1x8x1xf32>
    %411 = vector.shape_cast %410 : vector<1x8x1xf32> to vector<8x1xf32>
    %412 = vector.broadcast %411 : vector<8x1xf32> to vector<8x32xf32>
    %413 = arith.mulf %412, %16 : vector<8x32xf32>
    %414 = vector.extract_strided_slice %7 {offsets = [0, 0, 0], sizes = [1, 8, 1], strides = [1, 1, 1]} : vector<8x8x1xf32> to vector<1x8x1xf32>
    %415 = vector.shape_cast %414 : vector<1x8x1xf32> to vector<8x1xf32>
    %416 = vector.broadcast %415 : vector<8x1xf32> to vector<8x32xf32>
    %417 = arith.mulf %416, %18 : vector<8x32xf32>
    %418 = arith.addf %413, %417 : vector<8x32xf32>
    %419 = arith.mulf %418, %409 : vector<8x32xf32>
    %cst_65 = arith.constant 1.000000e+00 : f32
    %420 = vector.broadcast %cst_65 : f32 to vector<8x32xf32>
    %421 = arith.subf %420, %418 : vector<8x32xf32>
    %422 = arith.mulf %421, %372 : vector<8x32xf32>
    %423 = arith.addf %419, %422 : vector<8x32xf32>
    %c0_66 = arith.constant 0 : index
    %c0_67 = arith.constant 0 : index
    %424 = vector.load %arg8[%c0_66, %c0_67] : memref<32x128xf32, #tpu.memory_space<vmem>>, vector<32x128xf32>
    %cst_68 = arith.constant dense<0.000000e+00> : vector<8x128xf32>
    %425 = tpu.matmul %423, %424, %cst_68 {dimension_numbers = #tpu.dot_dimension_numbers<[1], [0], [0], [1], [0, 0, 1, 1], [], []>} : vector<8x32xf32>, vector<32x128xf32>, vector<8x128xf32> -> vector<8x128xf32>
    %c0_69 = arith.constant 0 : index
    %c0_70 = arith.constant 0 : index
    %426 = vector.load %arg9[%c0_69, %c0_70] : memref<1x128xf32, #tpu.memory_space<vmem>>, vector<1x128xf32>
    %427 = vector.broadcast %426 : vector<1x128xf32> to vector<8x128xf32>
    %428 = arith.addf %425, %427 : vector<8x128xf32>
    %c0_71 = arith.constant 0 : index
    %c0_72 = arith.constant 0 : index
    %429 = vector.load %arg10[%c0_71, %c0_72] : memref<8x128xf32, #tpu.memory_space<vmem>>, vector<8x128xf32>
    tpu.vector_store %arg10[%c0_71, %c0_72], %428 {strides = array<i32>} : memref<8x128xf32, #tpu.memory_space<vmem>>, vector<8x128xf32>,
    return
  }
  func.func @transform_0(%arg0: i32) -> (i32, i32, i32) {
    %c0_i32 = arith.constant 0 : i32
    %c0_i32_0 = arith.constant 0 : i32
    %c0_i32_1 = arith.constant 0 : i32
    return %c0_i32, %arg0, %c0_i32_0 : i32, i32, i32
  }
  func.func @transform_1(%arg0: i32) -> (i32, i32, i32) {
    %c0_i32 = arith.constant 0 : i32
    %c0_i32_0 = arith.constant 0 : i32
    %c0_i32_1 = arith.constant 0 : i32
    return %c0_i32, %arg0, %c0_i32_0 : i32, i32, i32
  }
  func.func @transform_2(%arg0: i32) -> (i32, i32) {
    %c0_i32 = arith.constant 0 : i32
    %c0_i32_0 = arith.constant 0 : i32
    %c0_i32_1 = arith.constant 0 : i32
    return %c0_i32, %c0_i32_0 : i32, i32
  }
  func.func @transform_3(%arg0: i32) -> (i32, i32) {
    %c0_i32 = arith.constant 0 : i32
    %c0_i32_0 = arith.constant 0 : i32
    %c0_i32_1 = arith.constant 0 : i32
    return %c0_i32, %c0_i32_0 : i32, i32
  }
  func.func @transform_4(%arg0: i32) -> (i32, i32) {
    %c0_i32 = arith.constant 0 : i32
    %c0_i32_0 = arith.constant 0 : i32
    %c0_i32_1 = arith.constant 0 : i32
    return %c0_i32, %c0_i32_0 : i32, i32
  }
  func.func @transform_5(%arg0: i32) -> (i32, i32) {
    %c0_i32 = arith.constant 0 : i32
    %c0_i32_0 = arith.constant 0 : i32
    %c0_i32_1 = arith.constant 0 : i32
    return %c0_i32, %c0_i32_0 : i32, i32
  }
  func.func @transform_6(%arg0: i32) -> (i32, i32) {
    %c0_i32 = arith.constant 0 : i32
    %c0_i32_0 = arith.constant 0 : i32
    %c0_i32_1 = arith.constant 0 : i32
    return %c0_i32, %c0_i32_0 : i32, i32
  }
  func.func @transform_7(%arg0: i32) -> (i32, i32) {
    %c0_i32 = arith.constant 0 : i32
    %c0_i32_0 = arith.constant 0 : i32
    %c0_i32_1 = arith.constant 0 : i32
    return %c0_i32, %c0_i32_0 : i32, i32
  }
  func.func @transform_8(%arg0: i32) -> (i32, i32) {
    %c0_i32 = arith.constant 0 : i32
    %c0_i32_0 = arith.constant 0 : i32
    %c0_i32_1 = arith.constant 0 : i32
    return %c0_i32, %c0_i32_0 : i32, i32
  }
  func.func @transform_9(%arg0: i32) -> (i32, i32) {
    %c0_i32 = arith.constant 0 : i32
    %c0_i32_0 = arith.constant 0 : i32
    return %arg0, %c0_i32 : i32, i32
  }
}

</mosaic_0001>

<llo_original>
// kernel: tpu_custom_call.1
$region0: #{tpu_custom_call.1}
  #allocation0 [shape = 'u32[]', space=smem, size = 0x4, offset = 0x4, fixed_abs, tag = 'smem constant byte address 0x4 - core index']
  #allocation1 [shape = 'u32[72,128]{1,0:T(1,128)}', space=vmem, size = 0x9000, scoped, tag = 'internal scratch']
  %s0 = inlined_call_operand.vmem [shape: f32[8,8,16], index: 0, kind: input, shape index: {}]
  %s1 = inlined_call_operand.vmem [shape: f32[8,8,1], index: 1, kind: input, shape index: {}]
  %s2 = inlined_call_operand.hbm [shape: f32[16,128], index: 2, kind: input, shape index: {}]
  %s3 = inlined_call_operand.vmem [shape: f32[1,128], index: 3, kind: input, shape index: {}]
  %s4 = inlined_call_operand.hbm [shape: f32[32,128], index: 4, kind: input, shape index: {}]
  %s5 = inlined_call_operand.vmem [shape: f32[1,128], index: 5, kind: input, shape index: {}]
  %s6 = inlined_call_operand.vmem [shape: f32[1,32], index: 6, kind: input, shape index: {}]
  %s7 = inlined_call_operand.hbm [shape: f32[32,128], index: 7, kind: input, shape index: {}]
  %s8 = inlined_call_operand.vmem [shape: f32[1,128], index: 8, kind: input, shape index: {}]
  %s9 = inlined_call_operand.hbm [shape: f32[8,128], index: 9, kind: output, shape index: {}]
  %s10 = sld [smem:[#allocation0]]
  $region58: #{tpu_custom_call.1} parent=0
    _
  %s12 = ssub.s32 1, %s10
  %s13 = scalar_select 0, %s12, %s10
  $region1: #{tpu_custom_call.1} parent=0
    #allocation2 [shape = 'u8[8192]{0}', space=vmem, size = 0x2000, scoped, tag = 'input window, operand 2, single buffered']
    #allocation3 [shape = 's32[1]{0}', space=sflag, size = 0x4, scoped, tag = 'scoped memory for tpu_custom_call.1']
    #allocation4 [shape = 's32[1]{0}', space=sflag, size = 0x4, scoped, tag = 'scoped memory for tpu_custom_call.1']
    #allocation5 [shape = 'u8[16384]{0}', space=vmem, size = 0x4000, scoped, tag = 'input window, operand 4, single buffered']
    #allocation6 [shape = 's32[1]{0}', space=sflag, size = 0x4, scoped, tag = 'scoped memory for tpu_custom_call.1']
    #allocation7 [shape = 'u8[16384]{0}', space=vmem, size = 0x4000, scoped, tag = 'input window, operand 7, single buffered']
    #allocation8 [shape = 'u8[4096]{0}', space=vmem, size = 0x1000, scoped, tag = 'output window, operand 0, single buffered']
    %14 = vsyncpa [#allocation3], 0
    %15 = vsyncpa [#allocation6], 0
    %16 = vsyncpa [#allocation4], 0
    // Predicated region
    $region2: #{tpu_custom_call.1} parent=1 // pred_check
      _
    $region3: #{tpu_custom_call.1} parent=1 // pred_check_branch
      %18 = sbr.rel (0) target = $region5
    $region4: #{tpu_custom_call.1} parent=1 // pred_region
      _
    $region5: #{tpu_custom_call.1} parent=1 // pred_fallthru
      _
    // Predicated region
    $region6: #{tpu_custom_call.1} parent=1 // pred_check
      _
    $region7: #{tpu_custom_call.1} parent=1 // pred_check_branch
      %20 = sbr.rel (0) target = $region9
    $region8: #{tpu_custom_call.1} parent=1 // pred_region
      _
    $region9: #{tpu_custom_call.1} parent=1 // pred_fallthru
      _
    // Predicated region
    $region10: #{tpu_custom_call.1} parent=1 // pred_check
      _
    $region11: #{tpu_custom_call.1} parent=1 // pred_check_branch
      %22 = sbr.rel (0) target = $region13
    $region12: #{tpu_custom_call.1} parent=1 // pred_region
      %24 = vsyncadd [#allocation3], 0
      %s25 = sshll.u32 %s2, 4
      %s26 = int_to_ptr.hbm [resolvable:$true] %s25
      %s27 = sshll.u32 [#allocation2], 4
      %s28 = int_to_ptr.vmem [resolvable:$true] %s27
      %33 = dma.hbm_to_vmem [thread:$0]  %s26, 256, %s28, [#allocation3], 128, 128, 8
    $region13: #{tpu_custom_call.1} parent=1 // pred_fallthru
      _
    // Predicated region
    $region14: #{tpu_custom_call.1} parent=1 // pred_check
      _
    $region15: #{tpu_custom_call.1} parent=1 // pred_check_branch
      %35 = sbr.rel (0) target = $region17
    $region16: #{tpu_custom_call.1} parent=1 // pred_region
      _
    $region17: #{tpu_custom_call.1} parent=1 // pred_fallthru
      _
    // Predicated region
    $region18: #{tpu_custom_call.1} parent=1 // pred_check
      _
    $region19: #{tpu_custom_call.1} parent=1 // pred_check_branch
      %37 = sbr.rel (0) target = $region21
    $region20: #{tpu_custom_call.1} parent=1 // pred_region
      %39 = vsyncadd [#allocation6], 0
      %s40 = sshll.u32 %s4, 4
      %s41 = int_to_ptr.hbm [resolvable:$true] %s40
      %s42 = sshll.u32 [#allocation5], 4
      %s43 = int_to_ptr.vmem [resolvable:$true] %s42
      %48 = dma.hbm_to_vmem [thread:$0]  %s41, 512, %s43, [#allocation6], 128, 128, 8
    $region21: #{tpu_custom_call.1} parent=1 // pred_fallthru
      _
    // Predicated region
    $region22: #{tpu_custom_call.1} parent=1 // pred_check
      _
    $region23: #{tpu_custom_call.1} parent=1 // pred_check_branch
      %50 = sbr.rel (0) target = $region25
    $region24: #{tpu_custom_call.1} parent=1 // pred_region
      _
    $region25: #{tpu_custom_call.1} parent=1 // pred_fallthru
      _
    // Predicated region
    $region26: #{tpu_custom_call.1} parent=1 // pred_check
      _
    $region27: #{tpu_custom_call.1} parent=1 // pred_check_branch
      %52 = sbr.rel (0) target = $region29
    $region28: #{tpu_custom_call.1} parent=1 // pred_region
      _
    $region29: #{tpu_custom_call.1} parent=1 // pred_fallthru
      _
    // Predicated region
    $region30: #{tpu_custom_call.1} parent=1 // pred_check
      _
    $region31: #{tpu_custom_call.1} parent=1 // pred_check_branch
      %54 = sbr.rel (0) target = $region33
    $region32: #{tpu_custom_call.1} parent=1 // pred_region
      %56 = vsyncadd [#allocation6], 0
      %s57 = sshll.u32 %s7, 4
      %s58 = int_to_ptr.hbm [resolvable:$true] %s57
      %s59 = sshll.u32 [#allocation7], 4
      %s60 = int_to_ptr.vmem [resolvable:$true] %s59
      %65 = dma.hbm_to_vmem [thread:$0]  %s58, 512, %s60, [#allocation6], 128, 128, 8
    $region33: #{tpu_custom_call.1} parent=1 // pred_fallthru
      _
    // Predicated region
    $region34: #{tpu_custom_call.1} parent=1 // pred_check
      _
    $region35: #{tpu_custom_call.1} parent=1 // pred_check_branch
      %67 = sbr.rel (0) target = $region37
    $region36: #{tpu_custom_call.1} parent=1 // pred_region
      _
    $region37: #{tpu_custom_call.1} parent=1 // pred_fallthru
      _
    // Predicated region
    $region38: #{tpu_custom_call.1} parent=1 // pred_check
      _
    $region39: #{tpu_custom_call.1} parent=1 // pred_check_branch
      %69 = sbr.rel (0) target = $region41
    $region40: #{tpu_custom_call.1} parent=1 // pred_region
      %71 = dma.done [#allocation3], 256
    $region41: #{tpu_custom_call.1} parent=1 // pred_fallthru
      _
    // Predicated region
    $region42: #{tpu_custom_call.1} parent=1 // pred_check
      _
    $region43: #{tpu_custom_call.1} parent=1 // pred_check_branch
      %73 = sbr.rel (0) target = $region45
    $region44: #{tpu_custom_call.1} parent=1 // pred_region
      %75 = dma.done [#allocation6], 512
    $region45: #{tpu_custom_call.1} parent=1 // pred_fallthru
      _
    // Predicated region
    $region46: #{tpu_custom_call.1} parent=1 // pred_check
      _
    $region47: #{tpu_custom_call.1} parent=1 // pred_check_branch
      %77 = sbr.rel (0) target = $region49
    $region48: #{tpu_custom_call.1} parent=1 // pred_region
      %79 = dma.done [#allocation6], 512
    $region49: #{tpu_custom_call.1} parent=1 // pred_fallthru
      _
    %v80 = vld [vmem:[%s0] sm:$0xff]
    %v81 = vld [vmem:[%s0 + $0x8] sm:$0xff]
    %v82 = vld [vmem:[%s0 + $0x10] sm:$0xff]
    %v83 = vld [vmem:[%s0 + $0x18] sm:$0xff]
    %v84 = vld [vmem:[%s0 + $0x20] sm:$0xff]
    %v85 = vld [vmem:[%s0 + $0x28] sm:$0xff]
    %v86 = vld [vmem:[%s0 + $0x30] sm:$0xff]
    %v87 = vld [vmem:[%s0 + $0x38] sm:$0xff]
    %v88 = vld [vmem:[#allocation2] sm:$0xff]
    %v89 = vld [vmem:[#allocation2 + $0x8] sm:$0xff]
    %v90 = vld [vmem:[%s3] sm:$0x1]
    %v92 = vperm.slane %v90, 0
    %vm94 = vcmask 130048
    %v96 = vsel %vm94, %v80, 0
    %v99 = vsel %vm94, %v81, 0
    %v102 = vsel %vm94, %v82, 0
    %v105 = vsel %vm94, %v83, 0
    %v108 = vsel %vm94, %v84, 0
    %v111 = vsel %vm94, %v85, 0
    %v114 = vsel %vm94, %v86, 0
    %v117 = vsel %vm94, %v87, 0
    %119 = vmatpush.msra.mxu0 0.0
    %120 = vmatpush.msra.mxu0 0.0
    %121 = vmatpush.msra.mxu0 0.0
    %122 = vmatpush.msra.mxu0 0.0
    %123 = vmatpush.msra.mxu0 0.0
    %124 = vmatpush.msra.mxu0 0.0
    %125 = vmatpush.msra.mxu0 0.0
    %126 = vmatpush.msra.mxu0 0.0
    %127 = vmatpush.msra.mxu0 0.0
    %128 = vmatpush.msra.mxu0 0.0
    %129 = vmatpush.msra.mxu0 0.0
    %130 = vmatpush.msra.mxu0 0.0
    %131 = vmatpush.msra.mxu0 0.0
    %132 = vmatpush.msra.mxu0 0.0
    %133 = vmatpush.msra.mxu0 %v89
    %134 = vmatpush.msra.mxu0 %v88
    %135 = vmatmul.f32.gmra.mxu0 %v96
    %v136 = vpop.f32.mrf.mxu0
    %v137 = vadd.f32 %v92, %v136
    %138 = vmatmul.f32.gmra.mxu0 %v99
    %v139 = vpop.f32.mrf.mxu0
    %v140 = vadd.f32 %v92, %v139
    %141 = vmatmul.f32.gmra.mxu0 %v102
    %v142 = vpop.f32.mrf.mxu0
    %v143 = vadd.f32 %v92, %v142
    %144 = vmatmul.f32.gmra.mxu0 %v105
    %v145 = vpop.f32.mrf.mxu0
    %v146 = vadd.f32 %v92, %v145
    %147 = vmatmul.f32.gmra.mxu0 %v108
    %v148 = vpop.f32.mrf.mxu0
    %v149 = vadd.f32 %v92, %v148
    %150 = vmatmul.f32.gmra.mxu0 %v111
    %v151 = vpop.f32.mrf.mxu0
    %v152 = vadd.f32 %v92, %v151
    %153 = vmatmul.f32.gmra.mxu0 %v114
    %v154 = vpop.f32.mrf.mxu0
    %v155 = vadd.f32 %v92, %v154
    %156 = vmatmul.f32.gmra.mxu0 %v117
    %v157 = vpop.f32.mrf.mxu0
    %v158 = vadd.f32 %v92, %v157
    %159 = vdwg.mxu0
    %v160 = vld [vmem:[%s1] sm:$0xff]
    %v161 = vld [vmem:[%s1 + $0x8] sm:$0xff]
    %v162 = vld [vmem:[%s1 + $0x10] sm:$0xff]
    %v163 = vld [vmem:[%s1 + $0x18] sm:$0xff]
    %v164 = vld [vmem:[%s1 + $0x20] sm:$0xff]
    %v165 = vld [vmem:[%s1 + $0x28] sm:$0xff]
    %v166 = vld [vmem:[%s1 + $0x30] sm:$0xff]
    %v167 = vld [vmem:[%s1 + $0x38] sm:$0xff]
    %v168 = vld [vmem:[#allocation5] sm:$0xff]
    %v169 = vld [vmem:[#allocation5 + $0x8] sm:$0xff]
    %v170 = vld [vmem:[#allocation5 + $0x10] sm:$0xff]
    %v171 = vld [vmem:[#allocation5 + $0x18] sm:$0xff]
    %v172 = vld [vmem:[%s5] sm:$0x1]
    %v174 = vperm.slane %v172, 0
    %v176 = vsub.f32 1.0, %v174
    %v177 = vld [vmem:[%s6] sm:$0x1]
    %v179 = vperm.slane %v177, 0
    %v181 = vsub.f32 1.0, %v179
    %v182 = vmul.f32 %v174, %v137
    %v183 = vmul.f32 %v176, %v158
    %v184 = vadd.f32 %v182, %v183
    %vm185 = vcmask 261120
    %v187 = vsel %vm185, 0.0, 0
    %189 = vmatpush.msra.mxu0 0.0
    %190 = vmatpush.msra.mxu0 0.0
    %191 = vmatpush.msra.mxu0 0.0
    %192 = vmatpush.msra.mxu0 0.0
    %193 = vmatpush.msra.mxu0 0.0
    %194 = vmatpush.msra.mxu0 0.0
    %195 = vmatpush.msra.mxu0 0.0
    %196 = vmatpush.msra.mxu0 0.0
    %197 = vmatpush.msra.mxu0 0.0
    %198 = vmatpush.msra.mxu0 0.0
    %199 = vmatpush.msra.mxu0 0.0
    %200 = vmatpush.msra.mxu0 0.0
    %201 = vmatpush.msra.mxu0 %v171
    %202 = vmatpush.msra.mxu0 %v170
    %203 = vmatpush.msra.mxu0 %v169
    %204 = vmatpush.msra.mxu0 %v168
    %205 = vmatmul.f32.gmra.mxu0 %v187
    %v206 = vpop.f32.mrf.mxu0
    %v207 = vadd.f32 0.0, %v206
    %208 = vdwg.mxu0
    %v209 = vadd.f32 %v184, %v207
    %v210 = vxor.u32 %v209, 2147483648
    %v211 = vmul.f32 %v210, 1.442695
    %v212 = vpow.pop %v211
    %v213 = vadd.f32 %v212, 1.0
    %v214 = vrcp.pop %v213
    %v215 = vmul.f32 %v213, %v214
    %v216 = vsub.f32 1.0, %v215
    %v217 = vmul.f32 %v214, %v216
    %v218 = vadd.f32 %v214, %v217
    %vm219 = vweird.f32 %v213
    %vm220 = vweird.f32 %v214
    %vm221 = vmor %vm219, %vm220
    %v222 = vsel %vm221, %v214, %v218
    %v223 = vand.u32 2147483647, %v213
    %vm224 = vcmp.eq.f32.partialorder %v223, 8.507059e+37
    %v225 = vand.u32 %v213, 2147483648
    %v226 = vor.u32 1.1754944e-38, %v225
    %v227 = vsel %vm224, %v226, %v222
    %v228 = vmul.f32 1.0, %v227
    %v229 = vtanh.pop %v209
    %v230 = vmul.f32 %v228, 0.0
    %232 = vrot.lane.b32.xlu0 %v229, 64
    %v233 = vpop.permute.xlu0 %232
    %v235 = vmul.f32 %v228, %v233
    %237 = vrot.lane.b32.xlu0 %v235, 32
    %v238 = vpop.permute.xlu0 %237
    %v240 = vadd.f32 %v230, %v238
    %v241 = vtanh.pop %v240
    %243 = vrot.lane.b32.xlu0 %v241, 64
    %v244 = vpop.permute.xlu0 %243
    %v246 = vmul.f32 %v228, %v244
    %248 = vset.pattern.permute.xlu0 0
    %249 = vperm.xlu0 %248, %v160
    %v250 = vpop.permute.xlu0 %249
    %v252 = vmul.f32 %v250, %v179
    %254 = vset.pattern.permute.xlu0 0
    %255 = vperm.xlu0 %254, %v167
    %v256 = vpop.permute.xlu0 %255
    %v258 = vmul.f32 %v256, %v181
    %v259 = vadd.f32 %v252, %v258
    %261 = vrot.lane.b32.xlu0 %v246, 32
    %v262 = vpop.permute.xlu0 %261
    %v264 = vmul.f32 %v259, %v262
    %v265 = vsub.f32 1.0, %v259
    %v266 = vmul.f32 %v265, 0.0
    %v267 = vadd.f32 %v264, %v266
    %269 = vrot.lane.b32.xlu0 %v240, 96
    %v270 = vpop.permute.xlu0 %269
    %v272 = vmul.f32 %v259, %v270
    %v273 = vadd.f32 %v272, %v266
    %v274 = vmul.f32 %v174, %v140
    %v275 = vmul.f32 %v176, %v155
    %v276 = vadd.f32 %v274, %v275
    %v278 = vsel %vm185, %v267, 0
    %280 = vmatpush.msra.mxu0 0.0
    %281 = vmatpush.msra.mxu0 0.0
    %282 = vmatpush.msra.mxu0 0.0
    %283 = vmatpush.msra.mxu0 0.0
    %284 = vmatpush.msra.mxu0 0.0
    %285 = vmatpush.msra.mxu0 0.0
    %286 = vmatpush.msra.mxu0 0.0
    %287 = vmatpush.msra.mxu0 0.0
    %288 = vmatpush.msra.mxu0 0.0
    %289 = vmatpush.msra.mxu0 0.0
    %290 = vmatpush.msra.mxu0 0.0
    %291 = vmatpush.msra.mxu0 0.0
    %292 = vmatpush.msra.mxu0 %v171
    %293 = vmatpush.msra.mxu0 %v170
    %294 = vmatpush.msra.mxu0 %v169
    %295 = vmatpush.msra.mxu0 %v168
    %296 = vmatmul.f32.gmra.mxu0 %v278
    %v297 = vpop.f32.mrf.mxu0
    %v298 = vadd.f32 0.0, %v297
    %299 = vdwg.mxu0
    %v300 = vadd.f32 %v276, %v298
    %v301 = vxor.u32 %v300, 2147483648
    %v302 = vmul.f32 %v301, 1.442695
    %v303 = vpow.pop %v302
    %v304 = vadd.f32 %v303, 1.0
    %v305 = vrcp.pop %v304
    %v306 = vmul.f32 %v304, %v305
    %v307 = vsub.f32 1.0, %v306
    %v308 = vmul.f32 %v305, %v307
    %v309 = vadd.f32 %v305, %v308
    %vm310 = vweird.f32 %v304
    %vm311 = vweird.f32 %v305
    %vm312 = vmor %vm310, %vm311
    %v313 = vsel %vm312, %v305, %v309
    %v314 = vand.u32 2147483647, %v304
    %vm315 = vcmp.eq.f32.partialorder %v314, 8.507059e+37
    %v316 = vand.u32 %v304, 2147483648
    %v317 = vor.u32 1.1754944e-38, %v316
    %v318 = vsel %vm315, %v317, %v313
    %v319 = vmul.f32 1.0, %v318
    %v320 = vtanh.pop %v300
    %322 = vrot.lane.b32.xlu0 %v273, 32
    %v323 = vpop.permute.xlu0 %322
    %v325 = vmul.f32 %v319, %v323
    %327 = vrot.lane.b32.xlu0 %v320, 64
    %v328 = vpop.permute.xlu0 %327
    %v330 = vmul.f32 %v319, %v328
    %332 = vrot.lane.b32.xlu0 %v330, 32
    %v333 = vpop.permute.xlu0 %332
    %v335 = vadd.f32 %v325, %v333
    %v336 = vtanh.pop %v335
    %338 = vrot.lane.b32.xlu0 %v336, 64
    %v339 = vpop.permute.xlu0 %338
    %v341 = vmul.f32 %v319, %v339
    %343 = vset.pattern.permute.xlu0 0
    %344 = vperm.xlu0 %343, %v161
    %v345 = vpop.permute.xlu0 %344
    %v347 = vmul.f32 %v345, %v179
    %349 = vset.pattern.permute.xlu0 0
    %350 = vperm.xlu0 %349, %v166
    %v351 = vpop.permute.xlu0 %350
    %v353 = vmul.f32 %v351, %v181
    %v354 = vadd.f32 %v347, %v353
    %356 = vrot.lane.b32.xlu0 %v341, 32
    %v357 = vpop.permute.xlu0 %356
    %v359 = vmul.f32 %v354, %v357
    %v360 = vsub.f32 1.0, %v354
    %v361 = vmul.f32 %v360, %v267
    %v362 = vadd.f32 %v359, %v361
    %364 = vrot.lane.b32.xlu0 %v335, 96
    %v365 = vpop.permute.xlu0 %364
    %v367 = vmul.f32 %v354, %v365
    %v368 = vmul.f32 %v360, %v273
    %v369 = vadd.f32 %v367, %v368
    %v370 = vmul.f32 %v174, %v143
    %v371 = vmul.f32 %v176, %v152
    %v372 = vadd.f32 %v370, %v371
    %v374 = vsel %vm185, %v362, 0
    %376 = vmatpush.msra.mxu0 0.0
    %377 = vmatpush.msra.mxu0 0.0
    %378 = vmatpush.msra.mxu0 0.0
    %379 = vmatpush.msra.mxu0 0.0
    %380 = vmatpush.msra.mxu0 0.0
    %381 = vmatpush.msra.mxu0 0.0
    %382 = vmatpush.msra.mxu0 0.0
    %383 = vmatpush.msra.mxu0 0.0
    %384 = vmatpush.msra.mxu0 0.0
    %385 = vmatpush.msra.mxu0 0.0
    %386 = vmatpush.msra.mxu0 0.0
    %387 = vmatpush.msra.mxu0 0.0
    %388 = vmatpush.msra.mxu0 %v171
    %389 = vmatpush.msra.mxu0 %v170
    %390 = vmatpush.msra.mxu0 %v169
    %391 = vmatpush.msra.mxu0 %v168
    %392 = vmatmul.f32.gmra.mxu0 %v374
    %v393 = vpop.f32.mrf.mxu0
    %v394 = vadd.f32 0.0, %v393
    %395 = vdwg.mxu0
    %v396 = vadd.f32 %v372, %v394
    %v397 = vxor.u32 %v396, 2147483648
    %v398 = vmul.f32 %v397, 1.442695
    %v399 = vpow.pop %v398
    %v400 = vadd.f32 %v399, 1.0
    %v401 = vrcp.pop %v400
    %v402 = vmul.f32 %v400, %v401
    %v403 = vsub.f32 1.0, %v402
    %v404 = vmul.f32 %v401, %v403
    %v405 = vadd.f32 %v401, %v404
    %vm406 = vweird.f32 %v400
    %vm407 = vweird.f32 %v401
    %vm408 = vmor %vm406, %vm407
    %v409 = vsel %vm408, %v401, %v405
    %v410 = vand.u32 2147483647, %v400
    %vm411 = vcmp.eq.f32.partialorder %v410, 8.507059e+37
    %v412 = vand.u32 %v400, 2147483648
    %v413 = vor.u32 1.1754944e-38, %v412
    %v414 = vsel %vm411, %v413, %v409
    %v415 = vmul.f32 1.0, %v414
    %v416 = vtanh.pop %v396
    %418 = vrot.lane.b32.xlu0 %v369, 32
    %v419 = vpop.permute.xlu0 %418
    %v421 = vmul.f32 %v415, %v419
    %423 = vrot.lane.b32.xlu0 %v416, 64
    %v424 = vpop.permute.xlu0 %423
    %v426 = vmul.f32 %v415, %v424
    %428 = vrot.lane.b32.xlu0 %v426, 32
    %v429 = vpop.permute.xlu0 %428
    %v431 = vadd.f32 %v421, %v429
    %v432 = vtanh.pop %v431
    %434 = vrot.lane.b32.xlu0 %v432, 64
    %v435 = vpop.permute.xlu0 %434
    %v437 = vmul.f32 %v415, %v435
    %439 = vset.pattern.permute.xlu0 0
    %440 = vperm.xlu0 %439, %v162
    %v441 = vpop.permute.xlu0 %440
    %v443 = vmul.f32 %v441, %v179
    %445 = vset.pattern.permute.xlu0 0
    %446 = vperm.xlu0 %445, %v165
    %v447 = vpop.permute.xlu0 %446
    %v449 = vmul.f32 %v447, %v181
    %v450 = vadd.f32 %v443, %v449
    %452 = vrot.lane.b32.xlu0 %v437, 32
    %v453 = vpop.permute.xlu0 %452
    %v455 = vmul.f32 %v450, %v453
    %v456 = vsub.f32 1.0, %v450
    %v457 = vmul.f32 %v456, %v362
    %v458 = vadd.f32 %v455, %v457
    %460 = vrot.lane.b32.xlu0 %v431, 96
    %v461 = vpop.permute.xlu0 %460
    %v463 = vmul.f32 %v450, %v461
    %v464 = vmul.f32 %v456, %v369
    %v465 = vadd.f32 %v463, %v464
    %v466 = vmul.f32 %v174, %v146
    %v467 = vmul.f32 %v176, %v149
    %v468 = vadd.f32 %v466, %v467
    %v470 = vsel %vm185, %v458, 0
    %472 = vmatpush.msra.mxu0 0.0
    %473 = vmatpush.msra.mxu0 0.0
    %474 = vmatpush.msra.mxu0 0.0
    %475 = vmatpush.msra.mxu0 0.0
    %476 = vmatpush.msra.mxu0 0.0
    %477 = vmatpush.msra.mxu0 0.0
    %478 = vmatpush.msra.mxu0 0.0
    %479 = vmatpush.msra.mxu0 0.0
    %480 = vmatpush.msra.mxu0 0.0
    %481 = vmatpush.msra.mxu0 0.0
    %482 = vmatpush.msra.mxu0 0.0
    %483 = vmatpush.msra.mxu0 0.0
    %484 = vmatpush.msra.mxu0 %v171
    %485 = vmatpush.msra.mxu0 %v170
    %486 = vmatpush.msra.mxu0 %v169
    %487 = vmatpush.msra.mxu0 %v168
    %488 = vmatmul.f32.gmra.mxu0 %v470
    %v489 = vpop.f32.mrf.mxu0
    %v490 = vadd.f32 0.0, %v489
    %491 = vdwg.mxu0
    %v492 = vadd.f32 %v468, %v490
    %v493 = vxor.u32 %v492, 2147483648
    %v494 = vmul.f32 %v493, 1.442695
    %v495 = vpow.pop %v494
    %v496 = vadd.f32 %v495, 1.0
    %v497 = vrcp.pop %v496
    %v498 = vmul.f32 %v496, %v497
    %v499 = vsub.f32 1.0, %v498
    %v500 = vmul.f32 %v497, %v499
    %v501 = vadd.f32 %v497, %v500
    %vm502 = vweird.f32 %v496
    %vm503 = vweird.f32 %v497
    %vm504 = vmor %vm502, %vm503
    %v505 = vsel %vm504, %v497, %v501
    %v506 = vand.u32 2147483647, %v496
    %vm507 = vcmp.eq.f32.partialorder %v506, 8.507059e+37
    %v508 = vand.u32 %v496, 2147483648
    %v509 = vor.u32 1.1754944e-38, %v508
    %v510 = vsel %vm507, %v509, %v505
    %v511 = vmul.f32 1.0, %v510
    %v512 = vtanh.pop %v492
    %514 = vrot.lane.b32.xlu0 %v465, 32
    %v515 = vpop.permute.xlu0 %514
    %v517 = vmul.f32 %v511, %v515
    %519 = vrot.lane.b32.xlu0 %v512, 64
    %v520 = vpop.permute.xlu0 %519
    %v522 = vmul.f32 %v511, %v520
    %524 = vrot.lane.b32.xlu0 %v522, 32
    %v525 = vpop.permute.xlu0 %524
    %v527 = vadd.f32 %v517, %v525
    %v528 = vtanh.pop %v527
    %530 = vrot.lane.b32.xlu0 %v528, 64
    %v531 = vpop.permute.xlu0 %530
    %v533 = vmul.f32 %v511, %v531
    %535 = vset.pattern.permute.xlu0 0
    %536 = vperm.xlu0 %535, %v163
    %v537 = vpop.permute.xlu0 %536
    %v539 = vmul.f32 %v537, %v179
    %541 = vset.pattern.permute.xlu0 0
    %542 = vperm.xlu0 %541, %v164
    %v543 = vpop.permute.xlu0 %542
    %v545 = vmul.f32 %v543, %v181
    %v546 = vadd.f32 %v539, %v545
    %548 = vrot.lane.b32.xlu0 %v533, 32
    %v549 = vpop.permute.xlu0 %548
    %v551 = vmul.f32 %v546, %v549
    %v552 = vsub.f32 1.0, %v546
    %v553 = vmul.f32 %v552, %v458
    %v554 = vadd.f32 %v551, %v553
    %556 = vrot.lane.b32.xlu0 %v527, 96
    %v557 = vpop.permute.xlu0 %556
    %v559 = vmul.f32 %v546, %v557
    %v560 = vmul.f32 %v552, %v465
    %v561 = vadd.f32 %v559, %v560
    %v562 = vmul.f32 %v174, %v149
    %v563 = vmul.f32 %v176, %v146
    %v564 = vadd.f32 %v562, %v563
    %v566 = vsel %vm185, %v554, 0
    %568 = vmatpush.msra.mxu0 0.0
    %569 = vmatpush.msra.mxu0 0.0
    %570 = vmatpush.msra.mxu0 0.0
    %571 = vmatpush.msra.mxu0 0.0
    %572 = vmatpush.msra.mxu0 0.0
    %573 = vmatpush.msra.mxu0 0.0
    %574 = vmatpush.msra.mxu0 0.0
    %575 = vmatpush.msra.mxu0 0.0
    %576 = vmatpush.msra.mxu0 0.0
    %577 = vmatpush.msra.mxu0 0.0
    %578 = vmatpush.msra.mxu0 0.0
    %579 = vmatpush.msra.mxu0 0.0
    %580 = vmatpush.msra.mxu0 %v171
    %581 = vmatpush.msra.mxu0 %v170
    %582 = vmatpush.msra.mxu0 %v169
    %583 = vmatpush.msra.mxu0 %v168
    %584 = vmatmul.f32.gmra.mxu0 %v566
    %v585 = vpop.f32.mrf.mxu0
    %v586 = vadd.f32 0.0, %v585
    %587 = vdwg.mxu0
    %v588 = vadd.f32 %v564, %v586
    %v589 = vxor.u32 %v588, 2147483648
    %v590 = vmul.f32 %v589, 1.442695
    %v591 = vpow.pop %v590
    %v592 = vadd.f32 %v591, 1.0
    %v593 = vrcp.pop %v592
    %v594 = vmul.f32 %v592, %v593
    %v595 = vsub.f32 1.0, %v594
    %v596 = vmul.f32 %v593, %v595
    %v597 = vadd.f32 %v593, %v596
    %vm598 = vweird.f32 %v592
    %vm599 = vweird.f32 %v593
    %vm600 = vmor %vm598, %vm599
    %v601 = vsel %vm600, %v593, %v597
    %v602 = vand.u32 2147483647, %v592
    %vm603 = vcmp.eq.f32.partialorder %v602, 8.507059e+37
    %v604 = vand.u32 %v592, 2147483648
    %v605 = vor.u32 1.1754944e-38, %v604
    %v606 = vsel %vm603, %v605, %v601
    %v607 = vmul.f32 1.0, %v606
    %v608 = vtanh.pop %v588
    %610 = vrot.lane.b32.xlu0 %v561, 32
    %v611 = vpop.permute.xlu0 %610
    %v613 = vmul.f32 %v607, %v611
    %615 = vrot.lane.b32.xlu0 %v608, 64
    %v616 = vpop.permute.xlu0 %615
    %v618 = vmul.f32 %v607, %v616
    %620 = vrot.lane.b32.xlu0 %v618, 32
    %v621 = vpop.permute.xlu0 %620
    %v623 = vadd.f32 %v613, %v621
    %v624 = vtanh.pop %v623
    %626 = vrot.lane.b32.xlu0 %v624, 64
    %v627 = vpop.permute.xlu0 %626
    %v629 = vmul.f32 %v607, %v627
    %v630 = vmul.f32 %v543, %v179
    %v631 = vmul.f32 %v537, %v181
    %v632 = vadd.f32 %v630, %v631
    %634 = vrot.lane.b32.xlu0 %v629, 32
    %v635 = vpop.permute.xlu0 %634
    %v637 = vmul.f32 %v632, %v635
    %v638 = vsub.f32 1.0, %v632
    %v639 = vmul.f32 %v638, %v554
    %v640 = vadd.f32 %v637, %v639
    %642 = vrot.lane.b32.xlu0 %v623, 96
    %v643 = vpop.permute.xlu0 %642
    %v645 = vmul.f32 %v632, %v643
    %v646 = vmul.f32 %v638, %v561
    %v647 = vadd.f32 %v645, %v646
    %v648 = vmul.f32 %v174, %v152
    %v649 = vmul.f32 %v176, %v143
    %v650 = vadd.f32 %v648, %v649
    %v652 = vsel %vm185, %v640, 0
    %654 = vmatpush.msra.mxu0 0.0
    %655 = vmatpush.msra.mxu0 0.0
    %656 = vmatpush.msra.mxu0 0.0
    %657 = vmatpush.msra.mxu0 0.0
    %658 = vmatpush.msra.mxu0 0.0
    %659 = vmatpush.msra.mxu0 0.0
    %660 = vmatpush.msra.mxu0 0.0
    %661 = vmatpush.msra.mxu0 0.0
    %662 = vmatpush.msra.mxu0 0.0
    %663 = vmatpush.msra.mxu0 0.0
    %664 = vmatpush.msra.mxu0 0.0
    %665 = vmatpush.msra.mxu0 0.0
    %666 = vmatpush.msra.mxu0 %v171
    %667 = vmatpush.msra.mxu0 %v170
    %668 = vmatpush.msra.mxu0 %v169
    %669 = vmatpush.msra.mxu0 %v168
    %670 = vmatmul.f32.gmra.mxu0 %v652
    %v671 = vpop.f32.mrf.mxu0
    %v672 = vadd.f32 0.0, %v671
    %673 = vdwg.mxu0
    %v674 = vadd.f32 %v650, %v672
    %v675 = vxor.u32 %v674, 2147483648
    %v676 = vmul.f32 %v675, 1.442695
    %v677 = vpow.pop %v676
    %v678 = vadd.f32 %v677, 1.0
    %v679 = vrcp.pop %v678
    %v680 = vmul.f32 %v678, %v679
    %v681 = vsub.f32 1.0, %v680
    %v682 = vmul.f32 %v679, %v681
    %v683 = vadd.f32 %v679, %v682
    %vm684 = vweird.f32 %v678
    %vm685 = vweird.f32 %v679
    %vm686 = vmor %vm684, %vm685
    %v687 = vsel %vm686, %v679, %v683
    %v688 = vand.u32 2147483647, %v678
    %vm689 = vcmp.eq.f32.partialorder %v688, 8.507059e+37
    %v690 = vand.u32 %v678, 2147483648
    %v691 = vor.u32 1.1754944e-38, %v690
    %v692 = vsel %vm689, %v691, %v687
    %v693 = vmul.f32 1.0, %v692
    %v694 = vtanh.pop %v674
    %696 = vrot.lane.b32.xlu0 %v647, 32
    %v697 = vpop.permute.xlu0 %696
    %v699 = vmul.f32 %v693, %v697
    %701 = vrot.lane.b32.xlu0 %v694, 64
    %v702 = vpop.permute.xlu0 %701
    %v704 = vmul.f32 %v693, %v702
    %706 = vrot.lane.b32.xlu0 %v704, 32
    %v707 = vpop.permute.xlu0 %706
    %v709 = vadd.f32 %v699, %v707
    %v710 = vtanh.pop %v709
    %712 = vrot.lane.b32.xlu0 %v710, 64
    %v713 = vpop.permute.xlu0 %712
    %v715 = vmul.f32 %v693, %v713
    %v716 = vmul.f32 %v447, %v179
    %v717 = vmul.f32 %v441, %v181
    %v718 = vadd.f32 %v716, %v717
    %720 = vrot.lane.b32.xlu0 %v715, 32
    %v721 = vpop.permute.xlu0 %720
    %v723 = vmul.f32 %v718, %v721
    %v724 = vsub.f32 1.0, %v718
    %v725 = vmul.f32 %v724, %v640
    %v726 = vadd.f32 %v723, %v725
    %728 = vrot.lane.b32.xlu0 %v709, 96
    %v729 = vpop.permute.xlu0 %728
    %v731 = vmul.f32 %v718, %v729
    %v732 = vmul.f32 %v724, %v647
    %v733 = vadd.f32 %v731, %v732
    %v734 = vmul.f32 %v174, %v155
    %v735 = vmul.f32 %v176, %v140
    %v736 = vadd.f32 %v734, %v735
    %v738 = vsel %vm185, %v726, 0
    %740 = vmatpush.msra.mxu0 0.0
    %741 = vmatpush.msra.mxu0 0.0
    %742 = vmatpush.msra.mxu0 0.0
    %743 = vmatpush.msra.mxu0 0.0
    %744 = vmatpush.msra.mxu0 0.0
    %745 = vmatpush.msra.mxu0 0.0
    %746 = vmatpush.msra.mxu0 0.0
    %747 = vmatpush.msra.mxu0 0.0
    %748 = vmatpush.msra.mxu0 0.0
    %749 = vmatpush.msra.mxu0 0.0
    %750 = vmatpush.msra.mxu0 0.0
    %751 = vmatpush.msra.mxu0 0.0
    %752 = vmatpush.msra.mxu0 %v171
    %753 = vmatpush.msra.mxu0 %v170
    %754 = vmatpush.msra.mxu0 %v169
    %755 = vmatpush.msra.mxu0 %v168
    %756 = vmatmul.f32.gmra.mxu0 %v738
    %v757 = vpop.f32.mrf.mxu0
    %v758 = vadd.f32 0.0, %v757
    %759 = vdwg.mxu0
    %v760 = vadd.f32 %v736, %v758
    %v761 = vxor.u32 %v760, 2147483648
    %v762 = vmul.f32 %v761, 1.442695
    %v763 = vpow.pop %v762
    %v764 = vadd.f32 %v763, 1.0
    %v765 = vrcp.pop %v764
    %v766 = vmul.f32 %v764, %v765
    %v767 = vsub.f32 1.0, %v766
    %v768 = vmul.f32 %v765, %v767
    %v769 = vadd.f32 %v765, %v768
    %vm770 = vweird.f32 %v764
    %vm771 = vweird.f32 %v765
    %vm772 = vmor %vm770, %vm771
    %v773 = vsel %vm772, %v765, %v769
    %v774 = vand.u32 2147483647, %v764
    %vm775 = vcmp.eq.f32.partialorder %v774, 8.507059e+37
    %v776 = vand.u32 %v764, 2147483648
    %v777 = vor.u32 1.1754944e-38, %v776
    %v778 = vsel %vm775, %v777, %v773
    %v779 = vmul.f32 1.0, %v778
    %v780 = vtanh.pop %v760
    %782 = vrot.lane.b32.xlu0 %v733, 32
    %v783 = vpop.permute.xlu0 %782
    %v785 = vmul.f32 %v779, %v783
    %787 = vrot.lane.b32.xlu0 %v780, 64
    %v788 = vpop.permute.xlu0 %787
    %v790 = vmul.f32 %v779, %v788
    %792 = vrot.lane.b32.xlu0 %v790, 32
    %v793 = vpop.permute.xlu0 %792
    %v795 = vadd.f32 %v785, %v793
    %v796 = vtanh.pop %v795
    %798 = vrot.lane.b32.xlu0 %v796, 64
    %v799 = vpop.permute.xlu0 %798
    %v801 = vmul.f32 %v779, %v799
    %v802 = vmul.f32 %v351, %v179
    %v803 = vmul.f32 %v345, %v181
    %v804 = vadd.f32 %v802, %v803
    %806 = vrot.lane.b32.xlu0 %v801, 32
    %v807 = vpop.permute.xlu0 %806
    %v809 = vmul.f32 %v804, %v807
    %v810 = vsub.f32 1.0, %v804
    %v811 = vmul.f32 %v810, %v726
    %v812 = vadd.f32 %v809, %v811
    %814 = vrot.lane.b32.xlu0 %v795, 96
    %v815 = vpop.permute.xlu0 %814
    %v817 = vmul.f32 %v804, %v815
    %v818 = vmul.f32 %v810, %v733
    %v819 = vadd.f32 %v817, %v818
    %v820 = vmul.f32 %v174, %v158
    %v821 = vmul.f32 %v176, %v137
    %v822 = vadd.f32 %v820, %v821
    %v824 = vsel %vm185, %v812, 0
    %826 = vmatpush.msra.mxu0 0.0
    %827 = vmatpush.msra.mxu0 0.0
    %828 = vmatpush.msra.mxu0 0.0
    %829 = vmatpush.msra.mxu0 0.0
    %830 = vmatpush.msra.mxu0 0.0
    %831 = vmatpush.msra.mxu0 0.0
    %832 = vmatpush.msra.mxu0 0.0
    %833 = vmatpush.msra.mxu0 0.0
    %834 = vmatpush.msra.mxu0 0.0
    %835 = vmatpush.msra.mxu0 0.0
    %836 = vmatpush.msra.mxu0 0.0
    %837 = vmatpush.msra.mxu0 0.0
    %838 = vmatpush.msra.mxu0 %v171
    %839 = vmatpush.msra.mxu0 %v170
    %840 = vmatpush.msra.mxu0 %v169
    %841 = vmatpush.msra.mxu0 %v168
    %842 = vmatmul.f32.gmra.mxu0 %v824
    %v843 = vpop.f32.mrf.mxu0
    %v844 = vadd.f32 0.0, %v843
    %845 = vdwg.mxu0
    %v846 = vadd.f32 %v822, %v844
    %v847 = vxor.u32 %v846, 2147483648
    %v848 = vmul.f32 %v847, 1.442695
    %v849 = vpow.pop %v848
    %v850 = vadd.f32 %v849, 1.0
    %v851 = vrcp.pop %v850
    %v852 = vmul.f32 %v850, %v851
    %v853 = vsub.f32 1.0, %v852
    %v854 = vmul.f32 %v851, %v853
    %v855 = vadd.f32 %v851, %v854
    %vm856 = vweird.f32 %v850
    %vm857 = vweird.f32 %v851
    %vm858 = vmor %vm856, %vm857
    %v859 = vsel %vm858, %v851, %v855
    %v860 = vand.u32 2147483647, %v850
    %vm861 = vcmp.eq.f32.partialorder %v860, 8.507059e+37
    %v862 = vand.u32 %v850, 2147483648
    %v863 = vor.u32 1.1754944e-38, %v862
    %v864 = vsel %vm861, %v863, %v859
    %v865 = vmul.f32 1.0, %v864
    %v866 = vtanh.pop %v846
    %868 = vrot.lane.b32.xlu0 %v819, 32
    %v869 = vpop.permute.xlu0 %868
    %v871 = vmul.f32 %v865, %v869
    %873 = vrot.lane.b32.xlu0 %v866, 64
    %v874 = vpop.permute.xlu0 %873
    %v876 = vmul.f32 %v865, %v874
    %878 = vrot.lane.b32.xlu0 %v876, 32
    %v879 = vpop.permute.xlu0 %878
    %v881 = vadd.f32 %v871, %v879
    %v882 = vtanh.pop %v881
    %884 = vrot.lane.b32.xlu0 %v882, 64
    %v885 = vpop.permute.xlu0 %884
    %v887 = vmul.f32 %v865, %v885
    %v888 = vmul.f32 %v256, %v179
    %v889 = vmul.f32 %v250, %v181
    %v890 = vadd.f32 %v888, %v889
    %892 = vrot.lane.b32.xlu0 %v887, 32
    %v893 = vpop.permute.xlu0 %892
    %v895 = vmul.f32 %v890, %v893
    %v896 = vsub.f32 1.0, %v890
    %v897 = vmul.f32 %v896, %v812
    %v898 = vadd.f32 %v895, %v897
    %v899 = vld [vmem:[#allocation7] sm:$0xff]
    %v900 = vld [vmem:[#allocation7 + $0x8] sm:$0xff]
    %v901 = vld [vmem:[#allocation7 + $0x10] sm:$0xff]
    %v902 = vld [vmem:[#allocation7 + $0x18] sm:$0xff]
    %v903 = vld [vmem:[%s8] sm:$0x1]
    %v905 = vperm.slane %v903, 0
    %v908 = vsel %vm185, %v898, 0
    %910 = vmatpush.msra.mxu0 0.0
    %911 = vmatpush.msra.mxu0 0.0
    %912 = vmatpush.msra.mxu0 0.0
    %913 = vmatpush.msra.mxu0 0.0
    %914 = vmatpush.msra.mxu0 0.0
    %915 = vmatpush.msra.mxu0 0.0
    %916 = vmatpush.msra.mxu0 0.0
    %917 = vmatpush.msra.mxu0 0.0
    %918 = vmatpush.msra.mxu0 0.0
    %919 = vmatpush.msra.mxu0 0.0
    %920 = vmatpush.msra.mxu0 0.0
    %921 = vmatpush.msra.mxu0 0.0
    %922 = vmatpush.msra.mxu0 %v902
    %923 = vmatpush.msra.mxu0 %v901
    %924 = vmatpush.msra.mxu0 %v900
    %925 = vmatpush.msra.mxu0 %v899
    %926 = vmatmul.f32.gmra.mxu0 %v908
    %v927 = vpop.f32.mrf.mxu0
    %v928 = vadd.f32 %v905, %v927
    %929 = vdwg.mxu0
    %930 = vst [vmem:[#allocation8] sm:$0xff] %v928
    // Predicated region
    $region50: #{tpu_custom_call.1} parent=1 // pred_check
      _
    $region51: #{tpu_custom_call.1} parent=1 // pred_check_branch
      %932 = sbr.rel (0) target = $region53
    $region52: #{tpu_custom_call.1} parent=1 // pred_region
      %934 = vsyncadd [#allocation4], 0
      %s936 = sshll.u32 [#allocation8], 4
      %s937 = int_to_ptr.vmem [resolvable:$true] %s936
      %s938 = sshll.u32 %s9, 4
      %s939 = int_to_ptr.hbm [resolvable:$true] %s938
      %941 = dma.vmem_to_hbm [thread:$0]  %s937, 128, %s939, [#allocation4]
    $region53: #{tpu_custom_call.1} parent=1 // pred_fallthru
      _
    // Predicated region
    $region54: #{tpu_custom_call.1} parent=1 // pred_check
      _
    $region55: #{tpu_custom_call.1} parent=1 // pred_check_branch
      %943 = sbr.rel (0) target = $region57
    $region56: #{tpu_custom_call.1} parent=1 // pred_region
      %945 = dma.done [#allocation4], 128
    $region57: #{tpu_custom_call.1} parent=1 // pred_fallthru
      _
    %946 = vsyncpa [#allocation3], 1
    %947 = vsyncpa [#allocation6], 1
    %948 = vsyncpa [#allocation4], 1

</llo_original>
